<compile_context>
chip_gen: v7x
topology: tpu7x:2x2x1
jax: 0.10.0
libtpu: 0.0.40
codegen_flags: <defaults>
</compile_context>

<pallas_src>
import numpy as np
import jax
import jax.numpy as jnp
from jax.experimental import pallas as pl
from jax.experimental.pallas import tpu as pltpu  # noqa: F401  (TPU backend)

EPS = 1e-5  # nn.InstanceNorm2d default eps


# ------------------------------ fused kernel ---------------------------------

def _make_kernel(dims, coff, goff):
    """Build the fused kernel closure over static dims + packed-slab offsets."""
    B = dims['B']
    C1, C2 = dims['C1'], dims['C2']
    P1, P2, KK = dims['P1'], dims['P2'], dims['KK']
    H2, T, Hh = dims['H2o'], dims['T'], dims['Hh']
    BC1, BC2 = B * C1, B * C2
    HW = B * 2 * Hh          # recurrent state width: (batch, direction, unit)
    GW = 3 * HW              # gate width:            (gate, batch, dir, unit)

    def kernel(p1_ref, cw_ref, gw_ref, o_ref):
        def cw(name):
            r0, r, c = coff[name]
            return cw_ref[r0:r0 + r, 0:c]

        def gw(name):
            r0, r, c = goff[name]
            return gw_ref[r0:r0 + r, 0:c]

        def inorm_relu(y):
            # InstanceNorm2d (affine=False, biased var), one reduction pass + ReLU.
            inv_n = 1.0 / y.shape[0]
            mu = jnp.sum(y, axis=0, keepdims=True) * inv_n
            ex2 = jnp.sum(y * y, axis=0, keepdims=True) * inv_n
            var = ex2 - mu * mu
            return jnp.maximum((y - mu) * jax.lax.rsqrt(var + EPS), 0.0)

        # ---- conv1: all batch elements at once (batch lives on the lane axis)
        y1 = jnp.dot(p1_ref[...], cw('w1'),
                     preferred_element_type=jnp.float32) + cw('b1')   # [P1, B*C1]
        y1 = inorm_relu(y1)

        # ---- conv2: in-VMEM im2col (constant selection matmul) + conv + IN + ReLU
        sel = jnp.dot(cw('s2'), y1,
                      preferred_element_type=jnp.float32)             # [KK*P2, B*C1]
        w2 = cw('w2')                                                  # [KK*B*C1, B*C2]
        y2 = cw('b2')
        for j in range(KK):
            y2 = y2 + jnp.dot(sel[j * P2:(j + 1) * P2, :],
                              w2[j * BC1:(j + 1) * BC1, :],
                              preferred_element_type=jnp.float32)      # [P2, B*C2]
        y2 = inorm_relu(y2)
        # TODO(synk): Dropout(0.2) is eval-mode identity (no RNG in the kernel).

        # ---- permute(0,3,1,2)+reshape fused with the hoisted GRU input
        #      projections: gi[t, gate*HW + b*2Hh + d*Hh + u] for all t, both dirs.
        wi = gw('wi')                                                  # [H2*B*C2, GW]
        gi = gw('bi')                                                  # [1, GW]
        for h2 in range(H2):
            gi = gi + jnp.dot(y2[h2 * T:(h2 + 1) * T, :],
                              wi[h2 * BC2:(h2 + 1) * BC2, :],
                              preferred_element_type=jnp.float32)      # [T, GW]

        # Per-step gate inputs (off the recurrence critical path): forward
        # columns read gi at time s, backward columns read gi at time T-1-s.
        fwd_cols = gw('fm') > 0.5                                      # [1, GW]
        g_steps = [jnp.where(fwd_cols, gi[s:s + 1, :], gi[T - 1 - s:T - s, :])
                   for s in range(T)]

        # ---- bidirectional GRU recurrence fused over gates/batch/direction:
        #      ONE [1, HW] @ [HW, GW] matmul per timestep on the serial chain.
        whbd = gw('wh')                                                # [HW, GW]
        bhn = gw('bhn')                                                # [1, HW]
        h = jnp.zeros((1, HW), jnp.float32)
        hs = []
        for s in range(T):                     # T is tiny & static -> unrolled
            gh = jnp.dot(h, whbd, preferred_element_type=jnp.float32)  # [1, GW]
            gs = g_steps[s]
            r = jax.nn.sigmoid(gs[:, 0:HW] + gh[:, 0:HW])
            z = jax.nn.sigmoid(gs[:, HW:2 * HW] + gh[:, HW:2 * HW])
            # b_hn stays inside the tanh gate, scaled by r (PyTorch semantics).
            n = jnp.tanh(gs[:, 2 * HW:3 * HW] + r * (gh[:, 2 * HW:3 * HW] + bhn))
            h = (1.0 - z) * n + z * h
            hs.append(h)

        # ---- assemble [B, T*2Hh] in registers; single full-block store ------
        rows = []
        for b in range(B):
            pieces = []
            for t in range(T):
                pieces.append(hs[t][:, b * 2 * Hh:b * 2 * Hh + Hh])              # fwd(t)
                pieces.append(hs[T - 1 - t][:, b * 2 * Hh + Hh:(b + 1) * 2 * Hh])  # bwd(t)
            rows.append(jnp.concatenate(pieces, axis=1))               # [1, T*2Hh]
        o_ref[...] = jnp.concatenate(rows, axis=0)                     # [B, T*2Hh]

    return kernel


# ------------------------------ one-time packing ------------------------------

def _pack(width, sections):
    """Pack 2-D blocks into one [rows, width] f32 slab; every block starts on a
    sublane (8-row) boundary.  Returns (slab, {name: (row0, rows, cols)})."""
    offs, blocks, row = {}, [], 0
    for name, arr in sections:
        arr = np.asarray(arr, np.float32)
        r, c = arr.shape
        rp = ((r + 7) // 8) * 8
        blk = np.zeros((rp, width), np.float32)
        blk[:r, :c] = arr
        offs[name] = (row, r, c)
        blocks.append(blk)
        row += rp
    return np.concatenate(blocks, axis=0), offs


def _selection_matrix(h_in, w_in, k, s, h_out, w_out):
    """Constant 0/1 matrix S with
       (S @ y)[j*P2 + p2, :] = y[(s*ho+kh)*w_in + (s*wo+kw), :]
    for j = kh*k + kw and p2 = ho*w_out + wo (conv2's im2col as one matmul)."""
    S = np.zeros((k * k * h_out * w_out, h_in * w_in), np.float32)
    for kh in range(k):
        for kw in range(k):
            j = kh * k + kw
            for ho in range(h_out):
                for wo in range(w_out):
                    S[j * h_out * w_out + ho * w_out + wo,
                      (s * ho + kh) * w_in + (s * wo + kw)] = 1.0
    return S


def build_query_encoder(params, cfg, input_shape):
    """One-time repack of the parameters (for a fixed input shape) into two
    packed slabs + a fused kernel.  Returns a jitted forward(x) -> [B, W, hid]."""
    B, Cin, H, W = input_shape
    k1, k2 = cfg.kernel_size
    s1, s2 = cfg.stride
    (w1, b1), (w2, b2) = params['convs']
    g = params['gru']

    w1 = np.asarray(w1, np.float32)
    b1 = np.asarray(b1, np.float32)
    w2 = np.asarray(w2, np.float32)
    b2 = np.asarray(b2, np.float32)
    C1, C2 = w1.shape[0], w2.shape[0]
    H1o, W1o = (H - k1) // s1 + 1, (W - k1) // s1 + 1
    H2o, W2o = (H1o - k2) // s2 + 1, (W1o - k2) // s2 + 1
    K1 = Cin * k1 * k1
    P1, P2, KK, T = H1o * W1o, H2o * W2o, k2 * k2, W2o
    Hh = cfg.hidden_size // 2
    HW, GW = B * 2 * Hh, 3 * B * 2 * Hh
    assert cfg.gru_input_size == C2 * H2o

    # ---- conv weights: block-diagonal over batch (batch on the lane axis) ----
    W1bd = np.zeros((B * K1, B * C1), np.float32)
    for b in range(B):
        W1bd[b * K1:(b + 1) * K1, b * C1:(b + 1) * C1] = w1.reshape(C1, K1).T
    b1t = np.tile(b1, B)[None, :]

    W2bd = np.zeros((KK * B * C1, B * C2), np.float32)
    for kh in range(k2):
        for kw in range(k2):
            j = kh * k2 + kw
            blk = w2[:, :, kh, kw].T                             # [C1, C2]
            for b in range(B):
                W2bd[j * B * C1 + b * C1:j * B * C1 + (b + 1) * C1,
                     b * C2:(b + 1) * C2] = blk
    b2t = np.tile(b2, B)[None, :]
    s2m = _selection_matrix(H1o, W1o, k2, s2, H2o, W2o)          # [KK*P2, P1]

    # ---- GRU weights: column layout (gate, batch, direction, unit) -----------
    wih = (np.asarray(g['wih_f'], np.float32), np.asarray(g['wih_b'], np.float32))
    whh = (np.asarray(g['whh_f'], np.float32), np.asarray(g['whh_b'], np.float32))
    bih = (np.asarray(g['bih_f'], np.float32), np.asarray(g['bih_b'], np.float32))
    bhh = (np.asarray(g['bhh_f'], np.float32), np.asarray(g['bhh_b'], np.float32))

    def col(gate, b, d):
        return gate * HW + b * 2 * Hh + d * Hh

    WI = np.zeros((H2o * B * C2, GW), np.float32)   # hoisted input projections
    BI = np.zeros((1, GW), np.float32)              # b_ih (+ folded b_hr, b_hz)
    WH = np.zeros((HW, GW), np.float32)             # block-diag recurrent weight
    BHN = np.zeros((1, HW), np.float32)             # b_hn (stays inside tanh)
    FM = np.zeros((1, GW), np.float32)              # 1.0 on forward-dir columns
    for d in range(2):                              # 0 = forward, 1 = backward
        for gate in range(3):                       # PyTorch order r, z, n
            wi_g = wih[d][gate * Hh:(gate + 1) * Hh, :]          # [Hh, C2*H2o]
            wh_g = whh[d][gate * Hh:(gate + 1) * Hh, :]          # [Hh, Hh]
            bi_g = bih[d][gate * Hh:(gate + 1) * Hh].copy()
            if gate < 2:                            # fold b_hr / b_hz only
                bi_g = bi_g + bhh[d][gate * Hh:(gate + 1) * Hh]
            for b in range(B):
                c0 = col(gate, b, d)
                for h2 in range(H2o):
                    WI[h2 * B * C2 + b * C2:h2 * B * C2 + (b + 1) * C2,
                       c0:c0 + Hh] = wi_g[:, h2::H2o].T          # [C2, Hh]
                BI[0, c0:c0 + Hh] = bi_g
                WH[b * 2 * Hh + d * Hh:b * 2 * Hh + (d + 1) * Hh,
                   c0:c0 + Hh] = wh_g.T
                if d == 0:
                    FM[0, c0:c0 + Hh] = 1.0
        for b in range(B):
            BHN[0, b * 2 * Hh + d * Hh:b * 2 * Hh + (d + 1) * Hh] = \
                bhh[d][2 * Hh:3 * Hh]

    conv_np, coff = _pack(max(B * C1, B * C2, P1),
                          [('w1', W1bd), ('b1', b1t), ('s2', s2m),
                           ('w2', W2bd), ('b2', b2t)])
    gru_np, goff = _pack(GW, [('wi', WI), ('bi', BI), ('wh', WH),
                              ('bhn', BHN), ('fm', FM)])

    dims = dict(B=B, C1=C1, C2=C2, P1=P1, P2=P2, KK=KK, H2o=H2o, T=T, Hh=Hh)
    kernel = _make_kernel(dims, coff, goff)
    conv_slab = jnp.asarray(conv_np)
    gru_slab = jnp.asarray(gru_np)

    def _forward(x, cslab, gslab):
        # self.gru.flatten_parameters() is a cuDNN memory-layout no-op here.
        # conv1 im2col stays outside: one tiny XLA fusion over the 4 KiB input.
        # TODO(synk): could move conv1's im2col in-kernel too if it ever matters.
        cols = [x[:, :, kh:kh + s1 * H1o:s1, kw:kw + s1 * W1o:s1]
                for kh in range(k1) for kw in range(k1)]      # each [B, Cin, H1o, W1o]
        p1x = jnp.stack(cols, axis=2).reshape(B * K1, P1).T   # [P1, B*K1] (b,c,kh,kw)
        out = pl.pallas_call(
            kernel,
            out_shape=jax.ShapeDtypeStruct((B, T * 2 * Hh), jnp.float32),
        )(p1x, cslab, gslab)
        return out.reshape(B, T, 2 * Hh)

    fwd = jax.jit(_forward)
    return lambda x: fwd(x, conv_slab, gru_slab)


# ------------------------------ config / params -------------------------------

class Config:
    kernel_size = [3, 3]
    stride = [2, 2]
    ch_in = [4, 8]
    ch_out = [8, 16]
    gru_input_size = 48      # C*H after the conv stack: 16 * 3
    hidden_size = 32         # GRU per-direction hidden = 16, bi-output = 32


def init_params(key, cfg):
    params = {'convs': []}
    for i in range(len(cfg.kernel_size)):
        key, k1, k2 = jax.random.split(key, 3)
        w = 0.1 * jax.random.normal(
            k1, (cfg.ch_out[i], cfg.ch_in[i], cfg.kernel_size[i], cfg.kernel_size[i]),
            jnp.float32)
        b = 0.1 * jax.random.normal(k2, (cfg.ch_out[i],), jnp.float32)
        params['convs'].append((w, b))
    H = cfg.hidden_size // 2
    I = cfg.gru_input_size
    gru = {}
    for sfx in ('f', 'b'):
        key, k1, k2, k3, k4 = jax.random.split(key, 5)
        gru['wih_' + sfx] = 0.1 * jax.random.normal(k1, (3 * H, I), jnp.float32)
        gru['whh_' + sfx] = 0.1 * jax.random.normal(k2, (3 * H, H), jnp.float32)
        gru['bih_' + sfx] = 0.1 * jax.random.normal(k3, (3 * H,), jnp.float32)
        gru['bhh_' + sfx] = 0.1 * jax.random.normal(k4, (3 * H,), jnp.float32)
    params['gru'] = gru
    return params


# ------------------------------ pure-JAX reference ----------------------------

def reference_forward(x, params, cfg):
    for i, (w, b) in enumerate(params['convs']):
        y = jax.lax.conv_general_dilated(
            x, w, (cfg.stride[i], cfg.stride[i]), 'VALID',
            dimension_numbers=('NCHW', 'OIHW', 'NCHW'))
        y = y + b[None, :, None, None]
        mean = y.mean(axis=(2, 3), keepdims=True)
        var = ((y - mean) ** 2).mean(axis=(2, 3), keepdims=True)
        x = jnp.maximum((y - mean) / jnp.sqrt(var + EPS), 0.0)
    B, C, H, W = x.shape
    x = jnp.transpose(x, (0, 3, 1, 2)).reshape(B, W, C * H)
    g = params['gru']
    Hh = cfg.hidden_size // 2
    T = x.shape[1]

    def run(wih, whh, bih, bhh, reverse):
        h = jnp.zeros((x.shape[0], Hh), jnp.float32)
        outs = [None] * T
        order = range(T - 1, -1, -1) if reverse else range(T)
        for t in order:
            gi = x[:, t, :] @ wih.T + bih
            gh = h @ whh.T + bhh
            r = jax.nn.sigmoid(gi[:, :Hh] + gh[:, :Hh])
            z = jax.nn.sigmoid(gi[:, Hh:2 * Hh] + gh[:, Hh:2 * Hh])
            n = jnp.tanh(gi[:, 2 * Hh:] + r * gh[:, 2 * Hh:])
            h = (1.0 - z) * n + z * h
            outs[t] = h
        return jnp.stack(outs, axis=1)

    yf = run(g['wih_f'], g['whh_f'], g['bih_f'], g['bhh_f'], False)
    yb = run(g['wih_b'], g['whh_b'], g['bih_b'], g['bhh_b'], True)
    return jnp.concatenate([yf, yb], axis=-1)


if __name__ == "__main__":
    cfg = Config()
    key = jax.random.PRNGKey(0)
    key, kx = jax.random.split(key)
    x = jax.random.normal(kx, (2, cfg.ch_in[0], 16, 16), jnp.float32)
    params = init_params(key, cfg)

    encoder = build_query_encoder(params, cfg, x.shape)   # one-time weight repack
    out = jax.block_until_ready(encoder(x))

    ref = reference_forward(x, params, cfg)
    assert out.shape == (2, 3, cfg.hidden_size), out.shape
    if not bool(jnp.allclose(out, ref, atol=5e-3, rtol=5e-3)):
        raise SystemExit(
            f"mismatch: max abs err {float(jnp.max(jnp.abs(out - ref)))}")
    print("KERNEL_OK")
</pallas_src>

<mosaic_0001>
module attributes {stable_mosaic.version = 11 : i64} {
  func.func @kernel(%arg0: memref<49x72xf32, #tpu.memory_space<vmem>>, %arg1: memref<320x49xf32, #tpu.memory_space<vmem>>, %arg2: memref<184x192xf32, #tpu.memory_space<vmem>>, %arg3: memref<2x96xf32, #tpu.memory_space<vmem>>) attributes {dimension_semantics = [], scalar_prefetch = 0 : i64, scratch_operands = 0 : i64, tpu.core_type = #tpu.core_type<tc>} {
    %c0 = arith.constant 0 : index
    %c0_0 = arith.constant 0 : index
    %0 = vector.load %arg0[%c0, %c0_0] : memref<49x72xf32, #tpu.memory_space<vmem>>, vector<49x72xf32>
    %c0_1 = arith.constant 0 : index
    %c0_2 = arith.constant 0 : index
    %1 = vector.load %arg1[%c0_1, %c0_2] : memref<320x49xf32, #tpu.memory_space<vmem>>, vector<72x16xf32>
    %cst = arith.constant dense<0.000000e+00> : vector<49x16xf32>
    %2 = tpu.matmul %0, %1, %cst {dimension_numbers = #tpu.dot_dimension_numbers<[1], [0], [0], [1], [0, 0, 1, 1], [], []>} : vector<49x72xf32>, vector<72x16xf32>, vector<49x16xf32> -> vector<49x16xf32>
    %c72 = arith.constant 72 : index
    %c0_3 = arith.constant 0 : index
    %3 = vector.load %arg1[%c72, %c0_3] : memref<320x49xf32, #tpu.memory_space<vmem>>, vector<1x16xf32>
    %4 = vector.broadcast %3 : vector<1x16xf32> to vector<49x16xf32>
    %5 = arith.addf %2, %4 : vector<49x16xf32>
    %cst_4 = arith.constant dense<0.000000e+00> : vector<16xf32>
    %6 = vector.multi_reduction <add>, %5, %cst_4 [0] : vector<49x16xf32> to vector<16xf32>
    %7 = vector.shape_cast %6 : vector<16xf32> to vector<1x16xf32>
    %cst_5 = arith.constant 0.0204081628 : f32
    %8 = vector.broadcast %cst_5 : f32 to vector<1x16xf32>
    %9 = arith.mulf %7, %8 : vector<1x16xf32>
    %10 = arith.mulf %5, %5 : vector<49x16xf32>
    %cst_6 = arith.constant dense<0.000000e+00> : vector<16xf32>
    %11 = vector.multi_reduction <add>, %10, %cst_6 [0] : vector<49x16xf32> to vector<16xf32>
    %12 = vector.shape_cast %11 : vector<16xf32> to vector<1x16xf32>
    %cst_7 = arith.constant 0.0204081628 : f32
    %13 = vector.broadcast %cst_7 : f32 to vector<1x16xf32>
    %14 = arith.mulf %12, %13 : vector<1x16xf32>
    %15 = arith.mulf %9, %9 : vector<1x16xf32>
    %16 = arith.subf %14, %15 : vector<1x16xf32>
    %17 = vector.broadcast %9 : vector<1x16xf32> to vector<49x16xf32>
    %18 = arith.subf %5, %17 : vector<49x16xf32>
    %cst_8 = arith.constant 9.99999974E-6 : f32
    %19 = vector.broadcast %cst_8 : f32 to vector<1x16xf32>
    %20 = arith.addf %16, %19 : vector<1x16xf32>
    %21 = math.rsqrt %20 : vector<1x16xf32>
    %22 = vector.broadcast %21 : vector<1x16xf32> to vector<49x16xf32>
    %23 = arith.mulf %18, %22 : vector<49x16xf32>
    %cst_9 = arith.constant 0.000000e+00 : f32
    %24 = vector.broadcast %cst_9 : f32 to vector<49x16xf32>
    %25 = arith.maximumf %23, %24 : vector<49x16xf32>
    %c80 = arith.constant 80 : index
    %c0_10 = arith.constant 0 : index
    %26 = vector.load %arg1[%c80, %c0_10] : memref<320x49xf32, #tpu.memory_space<vmem>>, vector<81x49xf32>
    %cst_11 = arith.constant dense<0.000000e+00> : vector<81x16xf32>
    %27 = tpu.matmul %26, %25, %cst_11 {dimension_numbers = #tpu.dot_dimension_numbers<[1], [0], [0], [1], [0, 0, 1, 1], [], []>} : vector<81x49xf32>, vector<49x16xf32>, vector<81x16xf32> -> vector<81x16xf32>
    %c168 = arith.constant 168 : index
    %c0_12 = arith.constant 0 : index
    %28 = vector.load %arg1[%c168, %c0_12] : memref<320x49xf32, #tpu.memory_space<vmem>>, vector<144x32xf32>
    %c312 = arith.constant 312 : index
    %c0_13 = arith.constant 0 : index
    %29 = vector.load %arg1[%c312, %c0_13] : memref<320x49xf32, #tpu.memory_space<vmem>>, vector<1x32xf32>
    %30 = vector.extract_strided_slice %27 {offsets = [0, 0], sizes = [9, 16], strides = [1, 1]} : vector<81x16xf32> to vector<9x16xf32>
    %31 = vector.extract_strided_slice %28 {offsets = [0, 0], sizes = [16, 32], strides = [1, 1]} : vector<144x32xf32> to vector<16x32xf32>
    %cst_14 = arith.constant dense<0.000000e+00> : vector<9x32xf32>
    %32 = tpu.matmul %30, %31, %cst_14 {dimension_numbers = #tpu.dot_dimension_numbers<[1], [0], [0], [1], [0, 0, 1, 1], [], []>} : vector<9x16xf32>, vector<16x32xf32>, vector<9x32xf32> -> vector<9x32xf32>
    %33 = vector.broadcast %29 : vector<1x32xf32> to vector<9x32xf32>
    %34 = arith.addf %33, %32 : vector<9x32xf32>
    %35 = vector.extract_strided_slice %27 {offsets = [9, 0], sizes = [9, 16], strides = [1, 1]} : vector<81x16xf32> to vector<9x16xf32>
    %36 = vector.extract_strided_slice %28 {offsets = [16, 0], sizes = [16, 32], strides = [1, 1]} : vector<144x32xf32> to vector<16x32xf32>
    %cst_15 = arith.constant dense<0.000000e+00> : vector<9x32xf32>
    %37 = tpu.matmul %35, %36, %cst_15 {dimension_numbers = #tpu.dot_dimension_numbers<[1], [0], [0], [1], [0, 0, 1, 1], [], []>} : vector<9x16xf32>, vector<16x32xf32>, vector<9x32xf32> -> vector<9x32xf32>
    %38 = arith.addf %34, %37 : vector<9x32xf32>
    %39 = vector.extract_strided_slice %27 {offsets = [18, 0], sizes = [9, 16], strides = [1, 1]} : vector<81x16xf32> to vector<9x16xf32>
    %40 = vector.extract_strided_slice %28 {offsets = [32, 0], sizes = [16, 32], strides = [1, 1]} : vector<144x32xf32> to vector<16x32xf32>
    %cst_16 = arith.constant dense<0.000000e+00> : vector<9x32xf32>
    %41 = tpu.matmul %39, %40, %cst_16 {dimension_numbers = #tpu.dot_dimension_numbers<[1], [0], [0], [1], [0, 0, 1, 1], [], []>} : vector<9x16xf32>, vector<16x32xf32>, vector<9x32xf32> -> vector<9x32xf32>
    %42 = arith.addf %38, %41 : vector<9x32xf32>
    %43 = vector.extract_strided_slice %27 {offsets = [27, 0], sizes = [9, 16], strides = [1, 1]} : vector<81x16xf32> to vector<9x16xf32>
    %44 = vector.extract_strided_slice %28 {offsets = [48, 0], sizes = [16, 32], strides = [1, 1]} : vector<144x32xf32> to vector<16x32xf32>
    %cst_17 = arith.constant dense<0.000000e+00> : vector<9x32xf32>
    %45 = tpu.matmul %43, %44, %cst_17 {dimension_numbers = #tpu.dot_dimension_numbers<[1], [0], [0], [1], [0, 0, 1, 1], [], []>} : vector<9x16xf32>, vector<16x32xf32>, vector<9x32xf32> -> vector<9x32xf32>
    %46 = arith.addf %42, %45 : vector<9x32xf32>
    %47 = vector.extract_strided_slice %27 {offsets = [36, 0], sizes = [9, 16], strides = [1, 1]} : vector<81x16xf32> to vector<9x16xf32>
    %48 = vector.extract_strided_slice %28 {offsets = [64, 0], sizes = [16, 32], strides = [1, 1]} : vector<144x32xf32> to vector<16x32xf32>
    %cst_18 = arith.constant dense<0.000000e+00> : vector<9x32xf32>
    %49 = tpu.matmul %47, %48, %cst_18 {dimension_numbers = #tpu.dot_dimension_numbers<[1], [0], [0], [1], [0, 0, 1, 1], [], []>} : vector<9x16xf32>, vector<16x32xf32>, vector<9x32xf32> -> vector<9x32xf32>
    %50 = arith.addf %46, %49 : vector<9x32xf32>
    %51 = vector.extract_strided_slice %27 {offsets = [45, 0], sizes = [9, 16], strides = [1, 1]} : vector<81x16xf32> to vector<9x16xf32>
    %52 = vector.extract_strided_slice %28 {offsets = [80, 0], sizes = [16, 32], strides = [1, 1]} : vector<144x32xf32> to vector<16x32xf32>
    %cst_19 = arith.constant dense<0.000000e+00> : vector<9x32xf32>
    %53 = tpu.matmul %51, %52, %cst_19 {dimension_numbers = #tpu.dot_dimension_numbers<[1], [0], [0], [1], [0, 0, 1, 1], [], []>} : vector<9x16xf32>, vector<16x32xf32>, vector<9x32xf32> -> vector<9x32xf32>
    %54 = arith.addf %50, %53 : vector<9x32xf32>
    %55 = vector.extract_strided_slice %27 {offsets = [54, 0], sizes = [9, 16], strides = [1, 1]} : vector<81x16xf32> to vector<9x16xf32>
    %56 = vector.extract_strided_slice %28 {offsets = [96, 0], sizes = [16, 32], strides = [1, 1]} : vector<144x32xf32> to vector<16x32xf32>
    %cst_20 = arith.constant dense<0.000000e+00> : vector<9x32xf32>
    %57 = tpu.matmul %55, %56, %cst_20 {dimension_numbers = #tpu.dot_dimension_numbers<[1], [0], [0], [1], [0, 0, 1, 1], [], []>} : vector<9x16xf32>, vector<16x32xf32>, vector<9x32xf32> -> vector<9x32xf32>
    %58 = arith.addf %54, %57 : vector<9x32xf32>
    %59 = vector.extract_strided_slice %27 {offsets = [63, 0], sizes = [9, 16], strides = [1, 1]} : vector<81x16xf32> to vector<9x16xf32>
    %60 = vector.extract_strided_slice %28 {offsets = [112, 0], sizes = [16, 32], strides = [1, 1]} : vector<144x32xf32> to vector<16x32xf32>
    %cst_21 = arith.constant dense<0.000000e+00> : vector<9x32xf32>
    %61 = tpu.matmul %59, %60, %cst_21 {dimension_numbers = #tpu.dot_dimension_numbers<[1], [0], [0], [1], [0, 0, 1, 1], [], []>} : vector<9x16xf32>, vector<16x32xf32>, vector<9x32xf32> -> vector<9x32xf32>
    %62 = arith.addf %58, %61 : vector<9x32xf32>
    %63 = vector.extract_strided_slice %27 {offsets = [72, 0], sizes = [9, 16], strides = [1, 1]} : vector<81x16xf32> to vector<9x16xf32>
    %64 = vector.extract_strided_slice %28 {offsets = [128, 0], sizes = [16, 32], strides = [1, 1]} : vector<144x32xf32> to vector<16x32xf32>
    %cst_22 = arith.constant dense<0.000000e+00> : vector<9x32xf32>
    %65 = tpu.matmul %63, %64, %cst_22 {dimension_numbers = #tpu.dot_dimension_numbers<[1], [0], [0], [1], [0, 0, 1, 1], [], []>} : vector<9x16xf32>, vector<16x32xf32>, vector<9x32xf32> -> vector<9x32xf32>
    %66 = arith.addf %62, %65 : vector<9x32xf32>
    %cst_23 = arith.constant dense<0.000000e+00> : vector<32xf32>
    %67 = vector.multi_reduction <add>, %66, %cst_23 [0] : vector<9x32xf32> to vector<32xf32>
    %68 = vector.shape_cast %67 : vector<32xf32> to vector<1x32xf32>
    %cst_24 = arith.constant 0.111111112 : f32
    %69 = vector.broadcast %cst_24 : f32 to vector<1x32xf32>
    %70 = arith.mulf %68, %69 : vector<1x32xf32>
    %71 = arith.mulf %66, %66 : vector<9x32xf32>
    %cst_25 = arith.constant dense<0.000000e+00> : vector<32xf32>
    %72 = vector.multi_reduction <add>, %71, %cst_25 [0] : vector<9x32xf32> to vector<32xf32>
    %73 = vector.shape_cast %72 : vector<32xf32> to vector<1x32xf32>
    %cst_26 = arith.constant 0.111111112 : f32
    %74 = vector.broadcast %cst_26 : f32 to vector<1x32xf32>
    %75 = arith.mulf %73, %74 : vector<1x32xf32>
    %76 = arith.mulf %70, %70 : vector<1x32xf32>
    %77 = arith.subf %75, %76 : vector<1x32xf32>
    %78 = vector.broadcast %70 : vector<1x32xf32> to vector<9x32xf32>
    %79 = arith.subf %66, %78 : vector<9x32xf32>
    %cst_27 = arith.constant 9.99999974E-6 : f32
    %80 = vector.broadcast %cst_27 : f32 to vector<1x32xf32>
    %81 = arith.addf %77, %80 : vector<1x32xf32>
    %82 = math.rsqrt %81 : vector<1x32xf32>
    %83 = vector.broadcast %82 : vector<1x32xf32> to vector<9x32xf32>
    %84 = arith.mulf %79, %83 : vector<9x32xf32>
    %cst_28 = arith.constant 0.000000e+00 : f32
    %85 = vector.broadcast %cst_28 : f32 to vector<9x32xf32>
    %86 = arith.maximumf %84, %85 : vector<9x32xf32>
    %c0_29 = arith.constant 0 : index
    %c0_30 = arith.constant 0 : index
    %87 = vector.load %arg2[%c0_29, %c0_30] : memref<184x192xf32, #tpu.memory_space<vmem>>, vector<96x192xf32>
    %c96 = arith.constant 96 : index
    %c0_31 = arith.constant 0 : index
    %88 = vector.load %arg2[%c96, %c0_31] : memref<184x192xf32, #tpu.memory_space<vmem>>, vector<1x192xf32>
    %89 = vector.extract_strided_slice %86 {offsets = [0, 0], sizes = [3, 32], strides = [1, 1]} : vector<9x32xf32> to vector<3x32xf32>
    %90 = vector.extract_strided_slice %87 {offsets = [0, 0], sizes = [32, 192], strides = [1, 1]} : vector<96x192xf32> to vector<32x192xf32>
    %cst_32 = arith.constant dense<0.000000e+00> : vector<3x192xf32>
    %91 = tpu.matmul %89, %90, %cst_32 {dimension_numbers = #tpu.dot_dimension_numbers<[1], [0], [0], [1], [0, 0, 1, 1], [], []>} : vector<3x32xf32>, vector<32x192xf32>, vector<3x192xf32> -> vector<3x192xf32>
    %92 = vector.broadcast %88 : vector<1x192xf32> to vector<3x192xf32>
    %93 = arith.addf %92, %91 : vector<3x192xf32>
    %94 = vector.extract_strided_slice %86 {offsets = [3, 0], sizes = [3, 32], strides = [1, 1]} : vector<9x32xf32> to vector<3x32xf32>
    %95 = vector.extract_strided_slice %87 {offsets = [32, 0], sizes = [32, 192], strides = [1, 1]} : vector<96x192xf32> to vector<32x192xf32>
    %cst_33 = arith.constant dense<0.000000e+00> : vector<3x192xf32>
    %96 = tpu.matmul %94, %95, %cst_33 {dimension_numbers = #tpu.dot_dimension_numbers<[1], [0], [0], [1], [0, 0, 1, 1], [], []>} : vector<3x32xf32>, vector<32x192xf32>, vector<3x192xf32> -> vector<3x192xf32>
    %97 = arith.addf %93, %96 : vector<3x192xf32>
    %98 = vector.extract_strided_slice %86 {offsets = [6, 0], sizes = [3, 32], strides = [1, 1]} : vector<9x32xf32> to vector<3x32xf32>
    %99 = vector.extract_strided_slice %87 {offsets = [64, 0], sizes = [32, 192], strides = [1, 1]} : vector<96x192xf32> to vector<32x192xf32>
    %cst_34 = arith.constant dense<0.000000e+00> : vector<3x192xf32>
    %100 = tpu.matmul %98, %99, %cst_34 {dimension_numbers = #tpu.dot_dimension_numbers<[1], [0], [0], [1], [0, 0, 1, 1], [], []>} : vector<3x32xf32>, vector<32x192xf32>, vector<3x192xf32> -> vector<3x192xf32>
    %101 = arith.addf %97, %100 : vector<3x192xf32>
    %c176 = arith.constant 176 : index
    %c0_35 = arith.constant 0 : index
    %102 = vector.load %arg2[%c176, %c0_35] : memref<184x192xf32, #tpu.memory_space<vmem>>, vector<1x192xf32>
    %cst_36 = arith.constant 5.000000e-01 : f32
    %103 = vector.broadcast %cst_36 : f32 to vector<1x192xf32>
    %104 = arith.cmpf ogt, %102, %103 : vector<1x192xf32>
    %105 = vector.extract_strided_slice %101 {offsets = [0, 0], sizes = [1, 192], strides = [1, 1]} : vector<3x192xf32> to vector<1x192xf32>
    %106 = vector.extract_strided_slice %101 {offsets = [2, 0], sizes = [1, 192], strides = [1, 1]} : vector<3x192xf32> to vector<1x192xf32>
    %107 = arith.select %104, %105, %106 : vector<1x192xi1>, vector<1x192xf32>
    %108 = vector.extract_strided_slice %101 {offsets = [1, 0], sizes = [1, 192], strides = [1, 1]} : vector<3x192xf32> to vector<1x192xf32>
    %109 = vector.extract_strided_slice %101 {offsets = [1, 0], sizes = [1, 192], strides = [1, 1]} : vector<3x192xf32> to vector<1x192xf32>
    %110 = arith.select %104, %108, %109 : vector<1x192xi1>, vector<1x192xf32>
    %111 = vector.extract_strided_slice %101 {offsets = [2, 0], sizes = [1, 192], strides = [1, 1]} : vector<3x192xf32> to vector<1x192xf32>
    %112 = vector.extract_strided_slice %101 {offsets = [0, 0], sizes = [1, 192], strides = [1, 1]} : vector<3x192xf32> to vector<1x192xf32>
    %113 = arith.select %104, %111, %112 : vector<1x192xi1>, vector<1x192xf32>
    %c104 = arith.constant 104 : index
    %c0_37 = arith.constant 0 : index
    %114 = vector.load %arg2[%c104, %c0_37] : memref<184x192xf32, #tpu.memory_space<vmem>>, vector<64x192xf32>
    %c168_38 = arith.constant 168 : index
    %c0_39 = arith.constant 0 : index
    %115 = vector.load %arg2[%c168_38, %c0_39] : memref<184x192xf32, #tpu.memory_space<vmem>>, vector<1x64xf32>
    %cst_40 = arith.constant 0.000000e+00 : f32
    %116 = vector.broadcast %cst_40 : f32 to vector<1x64xf32>
    %cst_41 = arith.constant dense<0.000000e+00> : vector<1x192xf32>
    %117 = tpu.matmul %116, %114, %cst_41 {dimension_numbers = #tpu.dot_dimension_numbers<[1], [0], [0], [1], [0, 0, 1, 1], [], []>} : vector<1x64xf32>, vector<64x192xf32>, vector<1x192xf32> -> vector<1x192xf32>
    %118 = vector.extract_strided_slice %107 {offsets = [0, 0], sizes = [1, 64], strides = [1, 1]} : vector<1x192xf32> to vector<1x64xf32>
    %119 = vector.extract_strided_slice %117 {offsets = [0, 0], sizes = [1, 64], strides = [1, 1]} : vector<1x192xf32> to vector<1x64xf32>
    %120 = arith.addf %118, %119 : vector<1x64xf32>
    %121 = arith.negf %120 : vector<1x64xf32>
    %122 = math.exp %121 : vector<1x64xf32>
    %cst_42 = arith.constant 1.000000e+00 : f32
    %123 = vector.broadcast %cst_42 : f32 to vector<1x64xf32>
    %124 = arith.addf %123, %122 : vector<1x64xf32>
    %125 = arith.divf %123, %124 : vector<1x64xf32>
    %126 = vector.extract_strided_slice %107 {offsets = [0, 64], sizes = [1, 64], strides = [1, 1]} : vector<1x192xf32> to vector<1x64xf32>
    %127 = vector.extract_strided_slice %117 {offsets = [0, 64], sizes = [1, 64], strides = [1, 1]} : vector<1x192xf32> to vector<1x64xf32>
    %128 = arith.addf %126, %127 : vector<1x64xf32>
    %129 = arith.negf %128 : vector<1x64xf32>
    %130 = math.exp %129 : vector<1x64xf32>
    %cst_43 = arith.constant 1.000000e+00 : f32
    %131 = vector.broadcast %cst_43 : f32 to vector<1x64xf32>
    %132 = arith.addf %131, %130 : vector<1x64xf32>
    %133 = arith.divf %131, %132 : vector<1x64xf32>
    %134 = vector.extract_strided_slice %107 {offsets = [0, 128], sizes = [1, 64], strides = [1, 1]} : vector<1x192xf32> to vector<1x64xf32>
    %135 = vector.extract_strided_slice %117 {offsets = [0, 128], sizes = [1, 64], strides = [1, 1]} : vector<1x192xf32> to vector<1x64xf32>
    %136 = arith.addf %135, %115 : vector<1x64xf32>
    %137 = arith.mulf %125, %136 : vector<1x64xf32>
    %138 = arith.addf %134, %137 : vector<1x64xf32>
    %139 = math.tanh %138 : vector<1x64xf32>
    %cst_44 = arith.constant 1.000000e+00 : f32
    %140 = vector.broadcast %cst_44 : f32 to vector<1x64xf32>
    %141 = arith.subf %140, %133 : vector<1x64xf32>
    %142 = arith.mulf %141, %139 : vector<1x64xf32>
    %143 = arith.mulf %133, %116 : vector<1x64xf32>
    %144 = arith.addf %142, %143 : vector<1x64xf32>
    %cst_45 = arith.constant dense<0.000000e+00> : vector<1x192xf32>
    %145 = tpu.matmul %144, %114, %cst_45 {dimension_numbers = #tpu.dot_dimension_numbers<[1], [0], [0], [1], [0, 0, 1, 1], [], []>} : vector<1x64xf32>, vector<64x192xf32>, vector<1x192xf32> -> vector<1x192xf32>
    %146 = vector.extract_strided_slice %110 {offsets = [0, 0], sizes = [1, 64], strides = [1, 1]} : vector<1x192xf32> to vector<1x64xf32>
    %147 = vector.extract_strided_slice %145 {offsets = [0, 0], sizes = [1, 64], strides = [1, 1]} : vector<1x192xf32> to vector<1x64xf32>
    %148 = arith.addf %146, %147 : vector<1x64xf32>
    %149 = arith.negf %148 : vector<1x64xf32>
    %150 = math.exp %149 : vector<1x64xf32>
    %cst_46 = arith.constant 1.000000e+00 : f32
    %151 = vector.broadcast %cst_46 : f32 to vector<1x64xf32>
    %152 = arith.addf %151, %150 : vector<1x64xf32>
    %153 = arith.divf %151, %152 : vector<1x64xf32>
    %154 = vector.extract_strided_slice %110 {offsets = [0, 64], sizes = [1, 64], strides = [1, 1]} : vector<1x192xf32> to vector<1x64xf32>
    %155 = vector.extract_strided_slice %145 {offsets = [0, 64], sizes = [1, 64], strides = [1, 1]} : vector<1x192xf32> to vector<1x64xf32>
    %156 = arith.addf %154, %155 : vector<1x64xf32>
    %157 = arith.negf %156 : vector<1x64xf32>
    %158 = math.exp %157 : vector<1x64xf32>
    %cst_47 = arith.constant 1.000000e+00 : f32
    %159 = vector.broadcast %cst_47 : f32 to vector<1x64xf32>
    %160 = arith.addf %159, %158 : vector<1x64xf32>
    %161 = arith.divf %159, %160 : vector<1x64xf32>
    %162 = vector.extract_strided_slice %110 {offsets = [0, 128], sizes = [1, 64], strides = [1, 1]} : vector<1x192xf32> to vector<1x64xf32>
    %163 = vector.extract_strided_slice %145 {offsets = [0, 128], sizes = [1, 64], strides = [1, 1]} : vector<1x192xf32> to vector<1x64xf32>
    %164 = arith.addf %163, %115 : vector<1x64xf32>
    %165 = arith.mulf %153, %164 : vector<1x64xf32>
    %166 = arith.addf %162, %165 : vector<1x64xf32>
    %167 = math.tanh %166 : vector<1x64xf32>
    %cst_48 = arith.constant 1.000000e+00 : f32
    %168 = vector.broadcast %cst_48 : f32 to vector<1x64xf32>
    %169 = arith.subf %168, %161 : vector<1x64xf32>
    %170 = arith.mulf %169, %167 : vector<1x64xf32>
    %171 = arith.mulf %161, %144 : vector<1x64xf32>
    %172 = arith.addf %170, %171 : vector<1x64xf32>
    %cst_49 = arith.constant dense<0.000000e+00> : vector<1x192xf32>
    %173 = tpu.matmul %172, %114, %cst_49 {dimension_numbers = #tpu.dot_dimension_numbers<[1], [0], [0], [1], [0, 0, 1, 1], [], []>} : vector<1x64xf32>, vector<64x192xf32>, vector<1x192xf32> -> vector<1x192xf32>
    %174 = vector.extract_strided_slice %113 {offsets = [0, 0], sizes = [1, 64], strides = [1, 1]} : vector<1x192xf32> to vector<1x64xf32>
    %175 = vector.extract_strided_slice %173 {offsets = [0, 0], sizes = [1, 64], strides = [1, 1]} : vector<1x192xf32> to vector<1x64xf32>
    %176 = arith.addf %174, %175 : vector<1x64xf32>
    %177 = arith.negf %176 : vector<1x64xf32>
    %178 = math.exp %177 : vector<1x64xf32>
    %cst_50 = arith.constant 1.000000e+00 : f32
    %179 = vector.broadcast %cst_50 : f32 to vector<1x64xf32>
    %180 = arith.addf %179, %178 : vector<1x64xf32>
    %181 = arith.divf %179, %180 : vector<1x64xf32>
    %182 = vector.extract_strided_slice %113 {offsets = [0, 64], sizes = [1, 64], strides = [1, 1]} : vector<1x192xf32> to vector<1x64xf32>
    %183 = vector.extract_strided_slice %173 {offsets = [0, 64], sizes = [1, 64], strides = [1, 1]} : vector<1x192xf32> to vector<1x64xf32>
    %184 = arith.addf %182, %183 : vector<1x64xf32>
    %185 = arith.negf %184 : vector<1x64xf32>
    %186 = math.exp %185 : vector<1x64xf32>
    %cst_51 = arith.constant 1.000000e+00 : f32
    %187 = vector.broadcast %cst_51 : f32 to vector<1x64xf32>
    %188 = arith.addf %187, %186 : vector<1x64xf32>
    %189 = arith.divf %187, %188 : vector<1x64xf32>
    %190 = vector.extract_strided_slice %113 {offsets = [0, 128], sizes = [1, 64], strides = [1, 1]} : vector<1x192xf32> to vector<1x64xf32>
    %191 = vector.extract_strided_slice %173 {offsets = [0, 128], sizes = [1, 64], strides = [1, 1]} : vector<1x192xf32> to vector<1x64xf32>
    %192 = arith.addf %191, %115 : vector<1x64xf32>
    %193 = arith.mulf %181, %192 : vector<1x64xf32>
    %194 = arith.addf %190, %193 : vector<1x64xf32>
    %195 = math.tanh %194 : vector<1x64xf32>
    %cst_52 = arith.constant 1.000000e+00 : f32
    %196 = vector.broadcast %cst_52 : f32 to vector<1x64xf32>
    %197 = arith.subf %196, %189 : vector<1x64xf32>
    %198 = arith.mulf %197, %195 : vector<1x64xf32>
    %199 = arith.mulf %189, %172 : vector<1x64xf32>
    %200 = arith.addf %198, %199 : vector<1x64xf32>
    %201 = vector.extract_strided_slice %144 {offsets = [0, 0], sizes = [1, 16], strides = [1, 1]} : vector<1x64xf32> to vector<1x16xf32>
    %202 = vector.extract_strided_slice %200 {offsets = [0, 16], sizes = [1, 16], strides = [1, 1]} : vector<1x64xf32> to vector<1x16xf32>
    %203 = vector.extract_strided_slice %172 {offsets = [0, 0], sizes = [1, 16], strides = [1, 1]} : vector<1x64xf32> to vector<1x16xf32>
    %204 = vector.extract_strided_slice %172 {offsets = [0, 16], sizes = [1, 16], strides = [1, 1]} : vector<1x64xf32> to vector<1x16xf32>
    %205 = vector.extract_strided_slice %200 {offsets = [0, 0], sizes = [1, 16], strides = [1, 1]} : vector<1x64xf32> to vector<1x16xf32>
    %206 = vector.extract_strided_slice %144 {offsets = [0, 16], sizes = [1, 16], strides = [1, 1]} : vector<1x64xf32> to vector<1x16xf32>
    %207 = tpu.concatenate %201, %202, %203, %204, %205, %206 in 1 : vector<1x16xf32>, vector<1x16xf32>, vector<1x16xf32>, vector<1x16xf32>, vector<1x16xf32>, vector<1x16xf32> -> vector<1x96xf32>
    %208 = vector.extract_strided_slice %144 {offsets = [0, 32], sizes = [1, 16], strides = [1, 1]} : vector<1x64xf32> to vector<1x16xf32>
    %209 = vector.extract_strided_slice %200 {offsets = [0, 48], sizes = [1, 16], strides = [1, 1]} : vector<1x64xf32> to vector<1x16xf32>
    %210 = vector.extract_strided_slice %172 {offsets = [0, 32], sizes = [1, 16], strides = [1, 1]} : vector<1x64xf32> to vector<1x16xf32>
    %211 = vector.extract_strided_slice %172 {offsets = [0, 48], sizes = [1, 16], strides = [1, 1]} : vector<1x64xf32> to vector<1x16xf32>
    %212 = vector.extract_strided_slice %200 {offsets = [0, 32], sizes = [1, 16], strides = [1, 1]} : vector<1x64xf32> to vector<1x16xf32>
    %213 = vector.extract_strided_slice %144 {offsets = [0, 48], sizes = [1, 16], strides = [1, 1]} : vector<1x64xf32> to vector<1x16xf32>
    %214 = tpu.concatenate %208, %209, %210, %211, %212, %213 in 1 : vector<1x16xf32>, vector<1x16xf32>, vector<1x16xf32>, vector<1x16xf32>, vector<1x16xf32>, vector<1x16xf32> -> vector<1x96xf32>
    %215 = tpu.concatenate %207, %214 in 0 : vector<1x96xf32>, vector<1x96xf32> -> vector<2x96xf32>
    %c0_53 = arith.constant 0 : index
    %c0_54 = arith.constant 0 : index
    %216 = vector.load %arg3[%c0_53, %c0_54] : memref<2x96xf32, #tpu.memory_space<vmem>>, vector<2x96xf32>
    tpu.vector_store %arg3[%c0_53, %c0_54], %215 {strides = array<i32>} : memref<2x96xf32, #tpu.memory_space<vmem>>, vector<2x96xf32>,
    return
  }
}

</mosaic_0001>

<llo_original>
// kernel: _forward.1
$region0: #{_forward.1}
  #allocation0 [shape = 'u32[]', space=smem, size = 0x4, offset = 0x4, fixed_abs, tag = 'smem constant byte address 0x4 - core index']
  #allocation1 [shape = 'u32[144,128]{1,0:T(1,128)}', space=vmem, size = 0x12000, scoped, tag = 'internal scratch']
  %s0 = inlined_call_operand.vmem [shape: f32[49,72], index: 0, kind: input, shape index: {}]
  %s1 = inlined_call_operand.vmem [shape: f32[320,49], index: 1, kind: input, shape index: {}]
  %s2 = inlined_call_operand.vmem [shape: f32[184,192], index: 2, kind: input, shape index: {}]
  %s3 = inlined_call_operand.vmem [shape: f32[2,96], index: 3, kind: output, shape index: {}]
  %s4 = sld [smem:[#allocation0]]
  $region22: #{_forward.1} parent=0
    _
  %s6 = ssub.s32 1, %s4
  %s7 = scalar_select 0, %s6, %s4
  // Predicated region
  $region2: #{_forward.1} parent=0 // pred_check
    _
  $region3: #{_forward.1} parent=0 // pred_check_branch
    %9 = sbr.rel (0) target = $region5
  $region4: #{_forward.1} parent=0 // pred_region
    _
  $region5: #{_forward.1} parent=0 // pred_fallthru
    _
  // Predicated region
  $region6: #{_forward.1} parent=0 // pred_check
    _
  $region7: #{_forward.1} parent=0 // pred_check_branch
    %11 = sbr.rel (0) target = $region9
  $region8: #{_forward.1} parent=0 // pred_region
    _
  $region9: #{_forward.1} parent=0 // pred_fallthru
    _
  // Predicated region
  $region10: #{_forward.1} parent=0 // pred_check
    _
  $region11: #{_forward.1} parent=0 // pred_check_branch
    %13 = sbr.rel (0) target = $region13
  $region12: #{_forward.1} parent=0 // pred_region
    _
  $region13: #{_forward.1} parent=0 // pred_fallthru
    _
  %v14 = vld [vmem:[%s0] sm:$0xff]
  %v15 = vld [vmem:[%s0 + $0x8] sm:$0xff]
  %v16 = vld [vmem:[%s0 + $0x10] sm:$0xff]
  %v17 = vld [vmem:[%s0 + $0x18] sm:$0xff]
  %v18 = vld [vmem:[%s0 + $0x20] sm:$0xff]
  %v19 = vld [vmem:[%s0 + $0x28] sm:$0xff]
  %v20 = vld [vmem:[%s0 + $0x30] sm:$0x1]
  %v21 = vld [vmem:[%s1] sm:$0xff]
  %v22 = vld [vmem:[%s1 + $0x8] sm:$0xff]
  %v23 = vld [vmem:[%s1 + $0x10] sm:$0xff]
  %v24 = vld [vmem:[%s1 + $0x18] sm:$0xff]
  %v25 = vld [vmem:[%s1 + $0x20] sm:$0xff]
  %v26 = vld [vmem:[%s1 + $0x28] sm:$0xff]
  %v27 = vld [vmem:[%s1 + $0x30] sm:$0xff]
  %v28 = vld [vmem:[%s1 + $0x38] sm:$0xff]
  %v29 = vld [vmem:[%s1 + $0x40] sm:$0xff]
  %v30 = vld [vmem:[%s1 + $0x48] sm:$0x1]
  %v31 = vlaneseq
  %v32 = vshrl.u32 %v31, 7
  %v33 = vsub.s32 0, %v32
  %v34 = vrot.slane %v30, %v33
  %vm35 = vcmask 588800
  %v37 = vsel %vm35, %v14, 0
  %v40 = vsel %vm35, %v15, 0
  %v43 = vsel %vm35, %v16, 0
  %v46 = vsel %vm35, %v17, 0
  %v49 = vsel %vm35, %v18, 0
  %v52 = vsel %vm35, %v19, 0
  %v55 = vsel %vm35, %v20, 0
  %57 = vmatprep.subr.mxu0 0.0
  %58 = vmatpush1.msra.mxu0 %v21
  %59 = vmatprep.subr.mxu0 0.0
  %60 = vmatpush1.msra.mxu0 %v22
  %61 = vmatprep.subr.mxu0 0.0
  %62 = vmatpush1.msra.mxu0 %v23
  %63 = vmatprep.subr.mxu0 0.0
  %64 = vmatpush1.msra.mxu0 %v24
  %65 = vmatprep.subr.mxu0 0.0
  %66 = vmatpush1.msra.mxu0 %v25
  %67 = vmatprep.subr.mxu0 0.0
  %68 = vmatpush1.msra.mxu0 %v26
  %69 = vmatprep.subr.mxu0 0.0
  %70 = vmatpush1.msra.mxu0 %v27
  %71 = vmatprep.subr.mxu0 0.0
  %72 = vmatpush1.msra.mxu0 %v28
  %73 = vmatprep.subr.mxu0 0.0
  %74 = vmatpush1.msra.mxu0 %v29
  %75 = vmatprep.subr.mxu0 0.0
  %76 = vmatpush1.msra.mxu0 0.0
  %77 = vmatprep.subr.mxu0 0.0
  %78 = vmatpush1.msra.mxu0 0.0
  %79 = vmatprep.subr.mxu0 0.0
  %80 = vmatpush1.msra.mxu0 0.0
  %81 = vmatprep.subr.mxu0 0.0
  %82 = vmatpush1.msra.mxu0 0.0
  %83 = vmatprep.subr.mxu0 0.0
  %84 = vmatpush1.msra.mxu0 0.0
  %85 = vmatprep.subr.mxu0 0.0
  %86 = vmatpush1.msra.mxu0 0.0
  %87 = vmatprep.subr.mxu0 0.0
  %88 = vmatpush1.msra.mxu0 0.0
  %89 = vmatprep.subr.mxu0 0.0
  %90 = vmatpush1.msra.mxu0 0.0
  %91 = vmatprep.subr.mxu0 0.0
  %92 = vmatpush1.msra.mxu0 0.0
  %93 = vmatprep.subr.mxu0 0.0
  %94 = vmatpush1.msra.mxu0 0.0
  %95 = vmatprep.subr.mxu0 0.0
  %96 = vmatpush1.msra.mxu0 0.0
  %97 = vmatprep.subr.mxu0 0.0
  %98 = vmatpush1.msra.mxu0 0.0
  %99 = vmatprep.subr.mxu0 0.0
  %100 = vmatpush1.msra.mxu0 0.0
  %101 = vmatprep.subr.mxu0 0.0
  %102 = vmatpush1.msra.mxu0 0.0
  %103 = vmatprep.subr.mxu0 0.0
  %104 = vmatpush1.msra.mxu0 0.0
  %105 = vmatprep.subr.mxu0 0.0
  %106 = vmatpush1.msra.mxu0 0.0
  %107 = vmatprep.subr.mxu0 0.0
  %108 = vmatpush1.msra.mxu0 0.0
  %109 = vmatprep.subr.mxu0 0.0
  %110 = vmatpush1.msra.mxu0 0.0
  %111 = vmatprep.subr.mxu0 0.0
  %112 = vmatpush1.msra.mxu0 0.0
  %113 = vmatprep.subr.mxu0 0.0
  %114 = vmatpush1.msra.mxu0 0.0
  %115 = vmatprep.subr.mxu0 0.0
  %116 = vmatpush1.msra.mxu0 0.0
  %117 = vmatprep.subr.mxu0 0.0
  %118 = vmatpush1.msra.mxu0 0.0
  %119 = vmatprep.subr.mxu0 0.0
  %120 = vmatpush1.msra.mxu0 0.0
  %121 = vmatprep.mubr.f32.mxu0 0.0
  %122 = vmatmul.mubr.f32.gmra.mrb[0].mxu0 %v37
  %v123 = vpop.f32.mrb[0].mxu0
  %v124 = vadd.f32 %v34, %v123
  %v125 = vpop.f32.mrb[0].mxu0
  %126 = vmatprep.mubr.f32.mxu0 0.0
  %127 = vmatmul.mubr.f32.gmra.mrb[0].mxu0 %v40
  %v128 = vpop.f32.mrb[0].mxu0
  %v129 = vadd.f32 %v34, %v128
  %v130 = vpop.f32.mrb[0].mxu0
  %131 = vmatprep.mubr.f32.mxu0 0.0
  %132 = vmatmul.mubr.f32.gmra.mrb[0].mxu0 %v43
  %v133 = vpop.f32.mrb[0].mxu0
  %v134 = vadd.f32 %v34, %v133
  %v135 = vpop.f32.mrb[0].mxu0
  %136 = vmatprep.mubr.f32.mxu0 0.0
  %137 = vmatmul.mubr.f32.gmra.mrb[0].mxu0 %v46
  %v138 = vpop.f32.mrb[0].mxu0
  %v139 = vadd.f32 %v34, %v138
  %v140 = vpop.f32.mrb[0].mxu0
  %141 = vmatprep.mubr.f32.mxu0 0.0
  %142 = vmatmul.mubr.f32.gmra.mrb[0].mxu0 %v49
  %v143 = vpop.f32.mrb[0].mxu0
  %v144 = vadd.f32 %v34, %v143
  %v145 = vpop.f32.mrb[0].mxu0
  %146 = vmatprep.mubr.f32.mxu0 0.0
  %147 = vmatmul.mubr.f32.gmra.mrb[0].mxu0 %v52
  %v148 = vpop.f32.mrb[0].mxu0
  %v149 = vadd.f32 %v34, %v148
  %v150 = vpop.f32.mrb[0].mxu0
  %151 = vmatprep.mubr.f32.mxu0 0.0
  %152 = vmatmul.mubr.f32.gmra.mrb[0].mxu0 %v55
  %v153 = vpop.f32.mrb[0].mxu0
  %v154 = vadd.f32 %v34, %v153
  %v155 = vpop.f32.mrb[0].mxu0
  %156 = vdwg.mxu0
  %vm157 = vcmask 130048
  %v158 = vsel %vm157, %v124, 0.0
  %v159 = vsel %vm157, %v129, 0.0
  %v160 = vadd.f32 %v158, %v159
  %v161 = vsel %vm157, %v134, 0.0
  %v162 = vadd.f32 %v160, %v161
  %v163 = vsel %vm157, %v139, 0.0
  %v164 = vadd.f32 %v162, %v163
  %v165 = vsel %vm157, %v144, 0.0
  %v166 = vadd.f32 %v164, %v165
  %v167 = vsel %vm157, %v149, 0.0
  %v168 = vadd.f32 %v166, %v167
  %vm169 = vcmask 122880
  %v170 = vsel %vm169, %v154, 0.0
  %v171 = vadd.f32 %v168, %v170
  %v172 = vrot.slane %v171, 4
  %v173 = vadd.f32 %v171, %v172
  %v174 = vrot.slane %v173, 2
  %v175 = vadd.f32 %v173, %v174
  %v176 = vrot.slane %v175, 1
  %v177 = vadd.f32 %v175, %v176
  %v178 = vmul.f32 %v177, 0.020408163
  %v179 = vmul.f32 %v124, %v124
  %v180 = vmul.f32 %v129, %v129
  %v181 = vmul.f32 %v134, %v134
  %v182 = vmul.f32 %v139, %v139
  %v183 = vmul.f32 %v144, %v144
  %v184 = vmul.f32 %v149, %v149
  %v185 = vmul.f32 %v154, %v154
  %v186 = vsel %vm157, %v179, 0.0
  %v187 = vsel %vm157, %v180, 0.0
  %v188 = vadd.f32 %v186, %v187
  %v189 = vsel %vm157, %v181, 0.0
  %v190 = vadd.f32 %v188, %v189
  %v191 = vsel %vm157, %v182, 0.0
  %v192 = vadd.f32 %v190, %v191
  %v193 = vsel %vm157, %v183, 0.0
  %v194 = vadd.f32 %v192, %v193
  %v195 = vsel %vm157, %v184, 0.0
  %v196 = vadd.f32 %v194, %v195
  %v197 = vsel %vm169, %v185, 0.0
  %v198 = vadd.f32 %v196, %v197
  %v199 = vrot.slane %v198, 4
  %v200 = vadd.f32 %v198, %v199
  %v201 = vrot.slane %v200, 2
  %v202 = vadd.f32 %v200, %v201
  %v203 = vrot.slane %v202, 1
  %v204 = vadd.f32 %v202, %v203
  %v205 = vmul.f32 %v204, 0.020408163
  %v206 = vmul.f32 %v178, %v178
  %v207 = vsub.f32 %v205, %v206
  %v208 = vsub.f32 %v124, %v178
  %v209 = vsub.f32 %v129, %v178
  %v210 = vsub.f32 %v134, %v178
  %v211 = vsub.f32 %v139, %v178
  %v212 = vsub.f32 %v144, %v178
  %v213 = vsub.f32 %v149, %v178
  %v214 = vsub.f32 %v154, %v178
  %v215 = vadd.f32 %v207, 1e-05
  %v216 = vrsqrt.pop %v215
  %v217 = vmul.f32 %v208, %v216
  %v218 = vmul.f32 %v209, %v216
  %v219 = vmul.f32 %v210, %v216
  %v220 = vmul.f32 %v211, %v216
  %v221 = vmul.f32 %v212, %v216
  %v222 = vmul.f32 %v213, %v216
  %v223 = vmul.f32 %v214, %v216
  %v224 = vmax.f32 %v217, 0.0
  %v225 = vmax.f32 %v218, 0.0
  %v226 = vmax.f32 %v219, 0.0
  %v227 = vmax.f32 %v220, 0.0
  %v228 = vmax.f32 %v221, 0.0
  %v229 = vmax.f32 %v222, 0.0
  %v230 = vmax.f32 %v223, 0.0
  %v231 = vld [vmem:[%s1 + $0x50] sm:$0xff]
  %v232 = vld [vmem:[%s1 + $0x58] sm:$0xff]
  %v233 = vld [vmem:[%s1 + $0x60] sm:$0xff]
  %v234 = vld [vmem:[%s1 + $0x68] sm:$0xff]
  %v235 = vld [vmem:[%s1 + $0x70] sm:$0xff]
  %v236 = vld [vmem:[%s1 + $0x78] sm:$0xff]
  %v237 = vld [vmem:[%s1 + $0x80] sm:$0xff]
  %v238 = vld [vmem:[%s1 + $0x88] sm:$0xff]
  %v239 = vld [vmem:[%s1 + $0x90] sm:$0xff]
  %v240 = vld [vmem:[%s1 + $0x98] sm:$0xff]
  %v241 = vld [vmem:[%s1 + $0xa0] sm:$0x1]
  %vm242 = vcmask 400384
  %v244 = vsel %vm242, %v231, 0
  %v247 = vsel %vm242, %v232, 0
  %v250 = vsel %vm242, %v233, 0
  %v253 = vsel %vm242, %v234, 0
  %v256 = vsel %vm242, %v235, 0
  %v259 = vsel %vm242, %v236, 0
  %v262 = vsel %vm242, %v237, 0
  %v265 = vsel %vm242, %v238, 0
  %v268 = vsel %vm242, %v239, 0
  %v271 = vsel %vm242, %v240, 0
  %v274 = vsel %vm242, %v241, 0
  %vm276 = vcmask 1040384
  %v278 = vsel %vm276, %v230, 0
  %280 = vmatprep.subr.mxu0 0.0
  %281 = vmatpush1.msra.mxu0 %v224
  %282 = vmatprep.subr.mxu0 0.0
  %283 = vmatpush1.msra.mxu0 %v225
  %284 = vmatprep.subr.mxu0 0.0
  %285 = vmatpush1.msra.mxu0 %v226
  %286 = vmatprep.subr.mxu0 0.0
  %287 = vmatpush1.msra.mxu0 %v227
  %288 = vmatprep.subr.mxu0 0.0
  %289 = vmatpush1.msra.mxu0 %v228
  %290 = vmatprep.subr.mxu0 0.0
  %291 = vmatpush1.msra.mxu0 %v229
  %292 = vmatprep.subr.mxu0 0.0
  %293 = vmatpush1.msra.mxu0 %v278
  %294 = vmatprep.subr.mxu0 0.0
  %295 = vmatpush1.msra.mxu0 0.0
  %296 = vmatprep.subr.mxu0 0.0
  %297 = vmatpush1.msra.mxu0 0.0
  %298 = vmatprep.subr.mxu0 0.0
  %299 = vmatpush1.msra.mxu0 0.0
  %300 = vmatprep.subr.mxu0 0.0
  %301 = vmatpush1.msra.mxu0 0.0
  %302 = vmatprep.subr.mxu0 0.0
  %303 = vmatpush1.msra.mxu0 0.0
  %304 = vmatprep.subr.mxu0 0.0
  %305 = vmatpush1.msra.mxu0 0.0
  %306 = vmatprep.subr.mxu0 0.0
  %307 = vmatpush1.msra.mxu0 0.0
  %308 = vmatprep.subr.mxu0 0.0
  %309 = vmatpush1.msra.mxu0 0.0
  %310 = vmatprep.subr.mxu0 0.0
  %311 = vmatpush1.msra.mxu0 0.0
  %312 = vmatprep.subr.mxu0 0.0
  %313 = vmatpush1.msra.mxu0 0.0
  %314 = vmatprep.subr.mxu0 0.0
  %315 = vmatpush1.msra.mxu0 0.0
  %316 = vmatprep.subr.mxu0 0.0
  %317 = vmatpush1.msra.mxu0 0.0
  %318 = vmatprep.subr.mxu0 0.0
  %319 = vmatpush1.msra.mxu0 0.0
  %320 = vmatprep.subr.mxu0 0.0
  %321 = vmatpush1.msra.mxu0 0.0
  %322 = vmatprep.subr.mxu0 0.0
  %323 = vmatpush1.msra.mxu0 0.0
  %324 = vmatprep.subr.mxu0 0.0
  %325 = vmatpush1.msra.mxu0 0.0
  %326 = vmatprep.subr.mxu0 0.0
  %327 = vmatpush1.msra.mxu0 0.0
  %328 = vmatprep.subr.mxu0 0.0
  %329 = vmatpush1.msra.mxu0 0.0
  %330 = vmatprep.subr.mxu0 0.0
  %331 = vmatpush1.msra.mxu0 0.0
  %332 = vmatprep.subr.mxu0 0.0
  %333 = vmatpush1.msra.mxu0 0.0
  %334 = vmatprep.subr.mxu0 0.0
  %335 = vmatpush1.msra.mxu0 0.0
  %336 = vmatprep.subr.mxu0 0.0
  %337 = vmatpush1.msra.mxu0 0.0
  %338 = vmatprep.subr.mxu0 0.0
  %339 = vmatpush1.msra.mxu0 0.0
  %340 = vmatprep.subr.mxu0 0.0
  %341 = vmatpush1.msra.mxu0 0.0
  %342 = vmatprep.subr.mxu0 0.0
  %343 = vmatpush1.msra.mxu0 0.0
  %344 = vmatprep.mubr.f32.mxu0 0.0
  %345 = vmatmul.mubr.f32.gmra.mrb[0].mxu0 %v244
  %v346 = vpop.f32.mrb[0].mxu0
  %v347 = vadd.f32 0.0, %v346
  %v348 = vpop.f32.mrb[0].mxu0
  %349 = vmatprep.mubr.f32.mxu0 0.0
  %350 = vmatmul.mubr.f32.gmra.mrb[0].mxu0 %v247
  %v351 = vpop.f32.mrb[0].mxu0
  %v352 = vadd.f32 0.0, %v351
  %v353 = vpop.f32.mrb[0].mxu0
  %354 = vmatprep.mubr.f32.mxu0 0.0
  %355 = vmatmul.mubr.f32.gmra.mrb[0].mxu0 %v250
  %v356 = vpop.f32.mrb[0].mxu0
  %v357 = vadd.f32 0.0, %v356
  %v358 = vpop.f32.mrb[0].mxu0
  %359 = vmatprep.mubr.f32.mxu0 0.0
  %360 = vmatmul.mubr.f32.gmra.mrb[0].mxu0 %v253
  %v361 = vpop.f32.mrb[0].mxu0
  %v362 = vadd.f32 0.0, %v361
  %v363 = vpop.f32.mrb[0].mxu0
  %364 = vmatprep.mubr.f32.mxu0 0.0
  %365 = vmatmul.mubr.f32.gmra.mrb[0].mxu0 %v256
  %v366 = vpop.f32.mrb[0].mxu0
  %v367 = vadd.f32 0.0, %v366
  %v368 = vpop.f32.mrb[0].mxu0
  %369 = vmatprep.mubr.f32.mxu0 0.0
  %370 = vmatmul.mubr.f32.gmra.mrb[0].mxu0 %v259
  %v371 = vpop.f32.mrb[0].mxu0
  %v372 = vadd.f32 0.0, %v371
  %v373 = vpop.f32.mrb[0].mxu0
  %374 = vmatprep.mubr.f32.mxu0 0.0
  %375 = vmatmul.mubr.f32.gmra.mrb[0].mxu0 %v262
  %v376 = vpop.f32.mrb[0].mxu0
  %v377 = vadd.f32 0.0, %v376
  %v378 = vpop.f32.mrb[0].mxu0
  %379 = vmatprep.mubr.f32.mxu0 0.0
  %380 = vmatmul.mubr.f32.gmra.mrb[0].mxu0 %v265
  %v381 = vpop.f32.mrb[0].mxu0
  %v382 = vadd.f32 0.0, %v381
  %v383 = vpop.f32.mrb[0].mxu0
  %384 = vmatprep.mubr.f32.mxu0 0.0
  %385 = vmatmul.mubr.f32.gmra.mrb[0].mxu0 %v268
  %v386 = vpop.f32.mrb[0].mxu0
  %v387 = vadd.f32 0.0, %v386
  %v388 = vpop.f32.mrb[0].mxu0
  %389 = vmatprep.mubr.f32.mxu0 0.0
  %390 = vmatmul.mubr.f32.gmra.mrb[0].mxu0 %v271
  %v391 = vpop.f32.mrb[0].mxu0
  %v392 = vadd.f32 0.0, %v391
  %v393 = vpop.f32.mrb[0].mxu0
  %394 = vmatprep.mubr.f32.mxu0 0.0
  %395 = vmatmul.mubr.f32.gmra.mrb[0].mxu0 %v274
  %v396 = vpop.f32.mrb[0].mxu0
  %v397 = vadd.f32 0.0, %v396
  %v398 = vpop.f32.mrb[0].mxu0
  %399 = vdwg.mxu0
  %v400 = vld [vmem:[%s1 + $0xa8] sm:$0xff]
  %v401 = vld [vmem:[%s1 + $0xb0] sm:$0xff]
  %v402 = vld [vmem:[%s1 + $0xb8] sm:$0xff]
  %v403 = vld [vmem:[%s1 + $0xc0] sm:$0xff]
  %v404 = vld [vmem:[%s1 + $0xc8] sm:$0xff]
  %v405 = vld [vmem:[%s1 + $0xd0] sm:$0xff]
  %v406 = vld [vmem:[%s1 + $0xd8] sm:$0xff]
  %v407 = vld [vmem:[%s1 + $0xe0] sm:$0xff]
  %v408 = vld [vmem:[%s1 + $0xe8] sm:$0xff]
  %v409 = vld [vmem:[%s1 + $0xf0] sm:$0xff]
  %v410 = vld [vmem:[%s1 + $0xf8] sm:$0xff]
  %v411 = vld [vmem:[%s1 + $0x100] sm:$0xff]
  %v412 = vld [vmem:[%s1 + $0x108] sm:$0xff]
  %v413 = vld [vmem:[%s1 + $0x110] sm:$0xff]
  %v414 = vld [vmem:[%s1 + $0x118] sm:$0xff]
  %v415 = vld [vmem:[%s1 + $0x120] sm:$0xff]
  %v416 = vld [vmem:[%s1 + $0x128] sm:$0xff]
  %v417 = vld [vmem:[%s1 + $0x130] sm:$0xff]
  %v418 = vld [vmem:[%s1 + $0x138] sm:$0x1]
  %v420 = vsel %vm157, %v347, 0
  %v423 = vsel %vm157, %v352, 0
  %425 = vmatprep.subr.mxu0 0.0
  %426 = vmatpush1.msra.mxu0 %v400
  %427 = vmatprep.subr.mxu0 0.0
  %428 = vmatpush1.msra.mxu0 %v401
  %429 = vmatprep.subr.mxu0 0.0
  %430 = vmatpush1.msra.mxu0 0.0
  %431 = vmatprep.subr.mxu0 0.0
  %432 = vmatpush1.msra.mxu0 0.0
  %433 = vmatprep.subr.mxu0 0.0
  %434 = vmatpush1.msra.mxu0 0.0
  %435 = vmatprep.subr.mxu0 0.0
  %436 = vmatpush1.msra.mxu0 0.0
  %437 = vmatprep.subr.mxu0 0.0
  %438 = vmatpush1.msra.mxu0 0.0
  %439 = vmatprep.subr.mxu0 0.0
  %440 = vmatpush1.msra.mxu0 0.0
  %441 = vmatprep.subr.mxu0 0.0
  %442 = vmatpush1.msra.mxu0 0.0
  %443 = vmatprep.subr.mxu0 0.0
  %444 = vmatpush1.msra.mxu0 0.0
  %445 = vmatprep.subr.mxu0 0.0
  %446 = vmatpush1.msra.mxu0 0.0
  %447 = vmatprep.subr.mxu0 0.0
  %448 = vmatpush1.msra.mxu0 0.0
  %449 = vmatprep.subr.mxu0 0.0
  %450 = vmatpush1.msra.mxu0 0.0
  %451 = vmatprep.subr.mxu0 0.0
  %452 = vmatpush1.msra.mxu0 0.0
  %453 = vmatprep.subr.mxu0 0.0
  %454 = vmatpush1.msra.mxu0 0.0
  %455 = vmatprep.subr.mxu0 0.0
  %456 = vmatpush1.msra.mxu0 0.0
  %457 = vmatprep.subr.mxu0 0.0
  %458 = vmatpush1.msra.mxu0 0.0
  %459 = vmatprep.subr.mxu0 0.0
  %460 = vmatpush1.msra.mxu0 0.0
  %461 = vmatprep.subr.mxu0 0.0
  %462 = vmatpush1.msra.mxu0 0.0
  %463 = vmatprep.subr.mxu0 0.0
  %464 = vmatpush1.msra.mxu0 0.0
  %465 = vmatprep.subr.mxu0 0.0
  %466 = vmatpush1.msra.mxu0 0.0
  %467 = vmatprep.subr.mxu0 0.0
  %468 = vmatpush1.msra.mxu0 0.0
  %469 = vmatprep.subr.mxu0 0.0
  %470 = vmatpush1.msra.mxu0 0.0
  %471 = vmatprep.subr.mxu0 0.0
  %472 = vmatpush1.msra.mxu0 0.0
  %473 = vmatprep.subr.mxu0 0.0
  %474 = vmatpush1.msra.mxu0 0.0
  %475 = vmatprep.subr.mxu0 0.0
  %476 = vmatpush1.msra.mxu0 0.0
  %477 = vmatprep.subr.mxu0 0.0
  %478 = vmatpush1.msra.mxu0 0.0
  %479 = vmatprep.subr.mxu0 0.0
  %480 = vmatpush1.msra.mxu0 0.0
  %481 = vmatprep.subr.mxu0 0.0
  %482 = vmatpush1.msra.mxu0 0.0
  %483 = vmatprep.subr.mxu0 0.0
  %484 = vmatpush1.msra.mxu0 0.0
  %485 = vmatprep.subr.mxu0 0.0
  %486 = vmatpush1.msra.mxu0 0.0
  %487 = vmatprep.subr.mxu0 0.0
  %488 = vmatpush1.msra.mxu0 0.0
  %489 = vmatprep.mubr.f32.mxu0 0.0
  %490 = vmatmul.mubr.f32.gmra.mrb[0].mxu0 %v420
  %v491 = vpop.f32.mrb[0].mxu0
  %v492 = vadd.f32 0.0, %v491
  %v493 = vpop.f32.mrb[0].mxu0
  %494 = vmatprep.mubr.f32.mxu0 0.0
  %495 = vmatmul.mubr.f32.gmra.mrb[0].mxu0 %v423
  %v496 = vpop.f32.mrb[0].mxu0
  %v497 = vadd.f32 0.0, %v496
  %v498 = vpop.f32.mrb[0].mxu0
  %499 = vdwg.mxu0
  %v500 = vlaneseq
  %v501 = vshrl.u32 %v500, 7
  %v502 = vsub.s32 0, %v501
  %v503 = vrot.slane %v418, %v502
  %v504 = vadd.f32 %v503, %v492
  %v505 = vadd.f32 %v503, %v497
  %vm507 = vcmask 1046528
  %v508 = vrot.slane %v352, 1
  %v509 = vrot.slane %v357, 1
  %v510 = vsel %vm507, %v508, %v509
  %v511 = vsel %vm157, %v510, 0
  %v513 = vsel %vm157, %v509, 0
  %515 = vmatprep.subr.mxu0 0.0
  %516 = vmatpush1.msra.mxu0 %v402
  %517 = vmatprep.subr.mxu0 0.0
  %518 = vmatpush1.msra.mxu0 %v403
  %519 = vmatprep.subr.mxu0 0.0
  %520 = vmatpush1.msra.mxu0 0.0
  %521 = vmatprep.subr.mxu0 0.0
  %522 = vmatpush1.msra.mxu0 0.0
  %523 = vmatprep.subr.mxu0 0.0
  %524 = vmatpush1.msra.mxu0 0.0
  %525 = vmatprep.subr.mxu0 0.0
  %526 = vmatpush1.msra.mxu0 0.0
  %527 = vmatprep.subr.mxu0 0.0
  %528 = vmatpush1.msra.mxu0 0.0
  %529 = vmatprep.subr.mxu0 0.0
  %530 = vmatpush1.msra.mxu0 0.0
  %531 = vmatprep.subr.mxu0 0.0
  %532 = vmatpush1.msra.mxu0 0.0
  %533 = vmatprep.subr.mxu0 0.0
  %534 = vmatpush1.msra.mxu0 0.0
  %535 = vmatprep.subr.mxu0 0.0
  %536 = vmatpush1.msra.mxu0 0.0
  %537 = vmatprep.subr.mxu0 0.0
  %538 = vmatpush1.msra.mxu0 0.0
  %539 = vmatprep.subr.mxu0 0.0
  %540 = vmatpush1.msra.mxu0 0.0
  %541 = vmatprep.subr.mxu0 0.0
  %542 = vmatpush1.msra.mxu0 0.0
  %543 = vmatprep.subr.mxu0 0.0
  %544 = vmatpush1.msra.mxu0 0.0
  %545 = vmatprep.subr.mxu0 0.0
  %546 = vmatpush1.msra.mxu0 0.0
  %547 = vmatprep.subr.mxu0 0.0
  %548 = vmatpush1.msra.mxu0 0.0
  %549 = vmatprep.subr.mxu0 0.0
  %550 = vmatpush1.msra.mxu0 0.0
  %551 = vmatprep.subr.mxu0 0.0
  %552 = vmatpush1.msra.mxu0 0.0
  %553 = vmatprep.subr.mxu0 0.0
  %554 = vmatpush1.msra.mxu0 0.0
  %555 = vmatprep.subr.mxu0 0.0
  %556 = vmatpush1.msra.mxu0 0.0
  %557 = vmatprep.subr.mxu0 0.0
  %558 = vmatpush1.msra.mxu0 0.0
  %559 = vmatprep.subr.mxu0 0.0
  %560 = vmatpush1.msra.mxu0 0.0
  %561 = vmatprep.subr.mxu0 0.0
  %562 = vmatpush1.msra.mxu0 0.0
  %563 = vmatprep.subr.mxu0 0.0
  %564 = vmatpush1.msra.mxu0 0.0
  %565 = vmatprep.subr.mxu0 0.0
  %566 = vmatpush1.msra.mxu0 0.0
  %567 = vmatprep.subr.mxu0 0.0
  %568 = vmatpush1.msra.mxu0 0.0
  %569 = vmatprep.subr.mxu0 0.0
  %570 = vmatpush1.msra.mxu0 0.0
  %571 = vmatprep.subr.mxu0 0.0
  %572 = vmatpush1.msra.mxu0 0.0
  %573 = vmatprep.subr.mxu0 0.0
  %574 = vmatpush1.msra.mxu0 0.0
  %575 = vmatprep.subr.mxu0 0.0
  %576 = vmatpush1.msra.mxu0 0.0
  %577 = vmatprep.subr.mxu0 0.0
  %578 = vmatpush1.msra.mxu0 0.0
  %579 = vmatprep.mubr.f32.mxu0 0.0
  %580 = vmatmul.mubr.f32.gmra.mrb[0].mxu0 %v511
  %v581 = vpop.f32.mrb[0].mxu0
  %v582 = vadd.f32 0.0, %v581
  %v583 = vpop.f32.mrb[0].mxu0
  %584 = vmatprep.mubr.f32.mxu0 0.0
  %585 = vmatmul.mubr.f32.gmra.mrb[0].mxu0 %v513
  %v586 = vpop.f32.mrb[0].mxu0
  %v587 = vadd.f32 0.0, %v586
  %v588 = vpop.f32.mrb[0].mxu0
  %589 = vdwg.mxu0
  %v590 = vadd.f32 %v504, %v582
  %v591 = vadd.f32 %v505, %v587
  %vm593 = vcmask 1045504
  %v594 = vrot.slane %v357, 2
  %v595 = vrot.slane %v362, 2
  %v596 = vsel %vm593, %v594, %v595
  %v597 = vsel %vm157, %v596, 0
  %v599 = vsel %vm157, %v595, 0
  %601 = vmatprep.subr.mxu0 0.0
  %602 = vmatpush1.msra.mxu0 %v404
  %603 = vmatprep.subr.mxu0 0.0
  %604 = vmatpush1.msra.mxu0 %v405
  %605 = vmatprep.subr.mxu0 0.0
  %606 = vmatpush1.msra.mxu0 0.0
  %607 = vmatprep.subr.mxu0 0.0
  %608 = vmatpush1.msra.mxu0 0.0
  %609 = vmatprep.subr.mxu0 0.0
  %610 = vmatpush1.msra.mxu0 0.0
  %611 = vmatprep.subr.mxu0 0.0
  %612 = vmatpush1.msra.mxu0 0.0
  %613 = vmatprep.subr.mxu0 0.0
  %614 = vmatpush1.msra.mxu0 0.0
  %615 = vmatprep.subr.mxu0 0.0
  %616 = vmatpush1.msra.mxu0 0.0
  %617 = vmatprep.subr.mxu0 0.0
  %618 = vmatpush1.msra.mxu0 0.0
  %619 = vmatprep.subr.mxu0 0.0
  %620 = vmatpush1.msra.mxu0 0.0
  %621 = vmatprep.subr.mxu0 0.0
  %622 = vmatpush1.msra.mxu0 0.0
  %623 = vmatprep.subr.mxu0 0.0
  %624 = vmatpush1.msra.mxu0 0.0
  %625 = vmatprep.subr.mxu0 0.0
  %626 = vmatpush1.msra.mxu0 0.0
  %627 = vmatprep.subr.mxu0 0.0
  %628 = vmatpush1.msra.mxu0 0.0
  %629 = vmatprep.subr.mxu0 0.0
  %630 = vmatpush1.msra.mxu0 0.0
  %631 = vmatprep.subr.mxu0 0.0
  %632 = vmatpush1.msra.mxu0 0.0
  %633 = vmatprep.subr.mxu0 0.0
  %634 = vmatpush1.msra.mxu0 0.0
  %635 = vmatprep.subr.mxu0 0.0
  %636 = vmatpush1.msra.mxu0 0.0
  %637 = vmatprep.subr.mxu0 0.0
  %638 = vmatpush1.msra.mxu0 0.0
  %639 = vmatprep.subr.mxu0 0.0
  %640 = vmatpush1.msra.mxu0 0.0
  %641 = vmatprep.subr.mxu0 0.0
  %642 = vmatpush1.msra.mxu0 0.0
  %643 = vmatprep.subr.mxu0 0.0
  %644 = vmatpush1.msra.mxu0 0.0
  %645 = vmatprep.subr.mxu0 0.0
  %646 = vmatpush1.msra.mxu0 0.0
  %647 = vmatprep.subr.mxu0 0.0
  %648 = vmatpush1.msra.mxu0 0.0
  %649 = vmatprep.subr.mxu0 0.0
  %650 = vmatpush1.msra.mxu0 0.0
  %651 = vmatprep.subr.mxu0 0.0
  %652 = vmatpush1.msra.mxu0 0.0
  %653 = vmatprep.subr.mxu0 0.0
  %654 = vmatpush1.msra.mxu0 0.0
  %655 = vmatprep.subr.mxu0 0.0
  %656 = vmatpush1.msra.mxu0 0.0
  %657 = vmatprep.subr.mxu0 0.0
  %658 = vmatpush1.msra.mxu0 0.0
  %659 = vmatprep.subr.mxu0 0.0
  %660 = vmatpush1.msra.mxu0 0.0
  %661 = vmatprep.subr.mxu0 0.0
  %662 = vmatpush1.msra.mxu0 0.0
  %663 = vmatprep.subr.mxu0 0.0
  %664 = vmatpush1.msra.mxu0 0.0
  %665 = vmatprep.mubr.f32.mxu0 0.0
  %666 = vmatmul.mubr.f32.gmra.mrb[0].mxu0 %v597
  %v667 = vpop.f32.mrb[0].mxu0
  %v668 = vadd.f32 0.0, %v667
  %v669 = vpop.f32.mrb[0].mxu0
  %670 = vmatprep.mubr.f32.mxu0 0.0
  %671 = vmatmul.mubr.f32.gmra.mrb[0].mxu0 %v599
  %v672 = vpop.f32.mrb[0].mxu0
  %v673 = vadd.f32 0.0, %v672
  %v674 = vpop.f32.mrb[0].mxu0
  %675 = vdwg.mxu0
  %v676 = vadd.f32 %v590, %v668
  %v677 = vadd.f32 %v591, %v673
  %vm679 = vcmask 1044480
  %v680 = vrot.slane %v362, 3
  %v681 = vrot.slane %v367, 3
  %v682 = vsel %vm679, %v680, %v681
  %v683 = vsel %vm157, %v682, 0
  %v685 = vsel %vm157, %v681, 0
  %687 = vmatprep.subr.mxu0 0.0
  %688 = vmatpush1.msra.mxu0 %v406
  %689 = vmatprep.subr.mxu0 0.0
  %690 = vmatpush1.msra.mxu0 %v407
  %691 = vmatprep.subr.mxu0 0.0
  %692 = vmatpush1.msra.mxu0 0.0
  %693 = vmatprep.subr.mxu0 0.0
  %694 = vmatpush1.msra.mxu0 0.0
  %695 = vmatprep.subr.mxu0 0.0
  %696 = vmatpush1.msra.mxu0 0.0
  %697 = vmatprep.subr.mxu0 0.0
  %698 = vmatpush1.msra.mxu0 0.0
  %699 = vmatprep.subr.mxu0 0.0
  %700 = vmatpush1.msra.mxu0 0.0
  %701 = vmatprep.subr.mxu0 0.0
  %702 = vmatpush1.msra.mxu0 0.0
  %703 = vmatprep.subr.mxu0 0.0
  %704 = vmatpush1.msra.mxu0 0.0
  %705 = vmatprep.subr.mxu0 0.0
  %706 = vmatpush1.msra.mxu0 0.0
  %707 = vmatprep.subr.mxu0 0.0
  %708 = vmatpush1.msra.mxu0 0.0
  %709 = vmatprep.subr.mxu0 0.0
  %710 = vmatpush1.msra.mxu0 0.0
  %711 = vmatprep.subr.mxu0 0.0
  %712 = vmatpush1.msra.mxu0 0.0
  %713 = vmatprep.subr.mxu0 0.0
  %714 = vmatpush1.msra.mxu0 0.0
  %715 = vmatprep.subr.mxu0 0.0
  %716 = vmatpush1.msra.mxu0 0.0
  %717 = vmatprep.subr.mxu0 0.0
  %718 = vmatpush1.msra.mxu0 0.0
  %719 = vmatprep.subr.mxu0 0.0
  %720 = vmatpush1.msra.mxu0 0.0
  %721 = vmatprep.subr.mxu0 0.0
  %722 = vmatpush1.msra.mxu0 0.0
  %723 = vmatprep.subr.mxu0 0.0
  %724 = vmatpush1.msra.mxu0 0.0
  %725 = vmatprep.subr.mxu0 0.0
  %726 = vmatpush1.msra.mxu0 0.0
  %727 = vmatprep.subr.mxu0 0.0
  %728 = vmatpush1.msra.mxu0 0.0
  %729 = vmatprep.subr.mxu0 0.0
  %730 = vmatpush1.msra.mxu0 0.0
  %731 = vmatprep.subr.mxu0 0.0
  %732 = vmatpush1.msra.mxu0 0.0
  %733 = vmatprep.subr.mxu0 0.0
  %734 = vmatpush1.msra.mxu0 0.0
  %735 = vmatprep.subr.mxu0 0.0
  %736 = vmatpush1.msra.mxu0 0.0
  %737 = vmatprep.subr.mxu0 0.0
  %738 = vmatpush1.msra.mxu0 0.0
  %739 = vmatprep.subr.mxu0 0.0
  %740 = vmatpush1.msra.mxu0 0.0
  %741 = vmatprep.subr.mxu0 0.0
  %742 = vmatpush1.msra.mxu0 0.0
  %743 = vmatprep.subr.mxu0 0.0
  %744 = vmatpush1.msra.mxu0 0.0
  %745 = vmatprep.subr.mxu0 0.0
  %746 = vmatpush1.msra.mxu0 0.0
  %747 = vmatprep.subr.mxu0 0.0
  %748 = vmatpush1.msra.mxu0 0.0
  %749 = vmatprep.subr.mxu0 0.0
  %750 = vmatpush1.msra.mxu0 0.0
  %751 = vmatprep.mubr.f32.mxu0 0.0
  %752 = vmatmul.mubr.f32.gmra.mrb[0].mxu0 %v683
  %v753 = vpop.f32.mrb[0].mxu0
  %v754 = vadd.f32 0.0, %v753
  %v755 = vpop.f32.mrb[0].mxu0
  %756 = vmatprep.mubr.f32.mxu0 0.0
  %757 = vmatmul.mubr.f32.gmra.mrb[0].mxu0 %v685
  %v758 = vpop.f32.mrb[0].mxu0
  %v759 = vadd.f32 0.0, %v758
  %v760 = vpop.f32.mrb[0].mxu0
  %761 = vdwg.mxu0
  %v762 = vadd.f32 %v676, %v754
  %v763 = vadd.f32 %v677, %v759
  %vm765 = vcmask 1043456
  %v766 = vrot.slane %v367, 4
  %v767 = vrot.slane %v372, 4
  %v768 = vsel %vm765, %v766, %v767
  %v769 = vsel %vm157, %v768, 0
  %v771 = vsel %vm157, %v767, 0
  %773 = vmatprep.subr.mxu0 0.0
  %774 = vmatpush1.msra.mxu0 %v408
  %775 = vmatprep.subr.mxu0 0.0
  %776 = vmatpush1.msra.mxu0 %v409
  %777 = vmatprep.subr.mxu0 0.0
  %778 = vmatpush1.msra.mxu0 0.0
  %779 = vmatprep.subr.mxu0 0.0
  %780 = vmatpush1.msra.mxu0 0.0
  %781 = vmatprep.subr.mxu0 0.0
  %782 = vmatpush1.msra.mxu0 0.0
  %783 = vmatprep.subr.mxu0 0.0
  %784 = vmatpush1.msra.mxu0 0.0
  %785 = vmatprep.subr.mxu0 0.0
  %786 = vmatpush1.msra.mxu0 0.0
  %787 = vmatprep.subr.mxu0 0.0
  %788 = vmatpush1.msra.mxu0 0.0
  %789 = vmatprep.subr.mxu0 0.0
  %790 = vmatpush1.msra.mxu0 0.0
  %791 = vmatprep.subr.mxu0 0.0
  %792 = vmatpush1.msra.mxu0 0.0
  %793 = vmatprep.subr.mxu0 0.0
  %794 = vmatpush1.msra.mxu0 0.0
  %795 = vmatprep.subr.mxu0 0.0
  %796 = vmatpush1.msra.mxu0 0.0
  %797 = vmatprep.subr.mxu0 0.0
  %798 = vmatpush1.msra.mxu0 0.0
  %799 = vmatprep.subr.mxu0 0.0
  %800 = vmatpush1.msra.mxu0 0.0
  %801 = vmatprep.subr.mxu0 0.0
  %802 = vmatpush1.msra.mxu0 0.0
  %803 = vmatprep.subr.mxu0 0.0
  %804 = vmatpush1.msra.mxu0 0.0
  %805 = vmatprep.subr.mxu0 0.0
  %806 = vmatpush1.msra.mxu0 0.0
  %807 = vmatprep.subr.mxu0 0.0
  %808 = vmatpush1.msra.mxu0 0.0
  %809 = vmatprep.subr.mxu0 0.0
  %810 = vmatpush1.msra.mxu0 0.0
  %811 = vmatprep.subr.mxu0 0.0
  %812 = vmatpush1.msra.mxu0 0.0
  %813 = vmatprep.subr.mxu0 0.0
  %814 = vmatpush1.msra.mxu0 0.0
  %815 = vmatprep.subr.mxu0 0.0
  %816 = vmatpush1.msra.mxu0 0.0
  %817 = vmatprep.subr.mxu0 0.0
  %818 = vmatpush1.msra.mxu0 0.0
  %819 = vmatprep.subr.mxu0 0.0
  %820 = vmatpush1.msra.mxu0 0.0
  %821 = vmatprep.subr.mxu0 0.0
  %822 = vmatpush1.msra.mxu0 0.0
  %823 = vmatprep.subr.mxu0 0.0
  %824 = vmatpush1.msra.mxu0 0.0
  %825 = vmatprep.subr.mxu0 0.0
  %826 = vmatpush1.msra.mxu0 0.0
  %827 = vmatprep.subr.mxu0 0.0
  %828 = vmatpush1.msra.mxu0 0.0
  %829 = vmatprep.subr.mxu0 0.0
  %830 = vmatpush1.msra.mxu0 0.0
  %831 = vmatprep.subr.mxu0 0.0
  %832 = vmatpush1.msra.mxu0 0.0
  %833 = vmatprep.subr.mxu0 0.0
  %834 = vmatpush1.msra.mxu0 0.0
  %835 = vmatprep.subr.mxu0 0.0
  %836 = vmatpush1.msra.mxu0 0.0
  %837 = vmatprep.mubr.f32.mxu0 0.0
  %838 = vmatmul.mubr.f32.gmra.mrb[0].mxu0 %v769
  %v839 = vpop.f32.mrb[0].mxu0
  %v840 = vadd.f32 0.0, %v839
  %v841 = vpop.f32.mrb[0].mxu0
  %842 = vmatprep.mubr.f32.mxu0 0.0
  %843 = vmatmul.mubr.f32.gmra.mrb[0].mxu0 %v771
  %v844 = vpop.f32.mrb[0].mxu0
  %v845 = vadd.f32 0.0, %v844
  %v846 = vpop.f32.mrb[0].mxu0
  %847 = vdwg.mxu0
  %v848 = vadd.f32 %v762, %v840
  %v849 = vadd.f32 %v763, %v845
  %vm851 = vcmask 1042432
  %v852 = vrot.slane %v372, 5
  %v853 = vrot.slane %v377, 5
  %v854 = vsel %vm851, %v852, %v853
  %v855 = vsel %vm157, %v854, 0
  %v857 = vsel %vm157, %v853, 0
  %859 = vmatprep.subr.mxu0 0.0
  %860 = vmatpush1.msra.mxu0 %v410
  %861 = vmatprep.subr.mxu0 0.0
  %862 = vmatpush1.msra.mxu0 %v411
  %863 = vmatprep.subr.mxu0 0.0
  %864 = vmatpush1.msra.mxu0 0.0
  %865 = vmatprep.subr.mxu0 0.0
  %866 = vmatpush1.msra.mxu0 0.0
  %867 = vmatprep.subr.mxu0 0.0
  %868 = vmatpush1.msra.mxu0 0.0
  %869 = vmatprep.subr.mxu0 0.0
  %870 = vmatpush1.msra.mxu0 0.0
  %871 = vmatprep.subr.mxu0 0.0
  %872 = vmatpush1.msra.mxu0 0.0
  %873 = vmatprep.subr.mxu0 0.0
  %874 = vmatpush1.msra.mxu0 0.0
  %875 = vmatprep.subr.mxu0 0.0
  %876 = vmatpush1.msra.mxu0 0.0
  %877 = vmatprep.subr.mxu0 0.0
  %878 = vmatpush1.msra.mxu0 0.0
  %879 = vmatprep.subr.mxu0 0.0
  %880 = vmatpush1.msra.mxu0 0.0
  %881 = vmatprep.subr.mxu0 0.0
  %882 = vmatpush1.msra.mxu0 0.0
  %883 = vmatprep.subr.mxu0 0.0
  %884 = vmatpush1.msra.mxu0 0.0
  %885 = vmatprep.subr.mxu0 0.0
  %886 = vmatpush1.msra.mxu0 0.0
  %887 = vmatprep.subr.mxu0 0.0
  %888 = vmatpush1.msra.mxu0 0.0
  %889 = vmatprep.subr.mxu0 0.0
  %890 = vmatpush1.msra.mxu0 0.0
  %891 = vmatprep.subr.mxu0 0.0
  %892 = vmatpush1.msra.mxu0 0.0
  %893 = vmatprep.subr.mxu0 0.0
  %894 = vmatpush1.msra.mxu0 0.0
  %895 = vmatprep.subr.mxu0 0.0
  %896 = vmatpush1.msra.mxu0 0.0
  %897 = vmatprep.subr.mxu0 0.0
  %898 = vmatpush1.msra.mxu0 0.0
  %899 = vmatprep.subr.mxu0 0.0
  %900 = vmatpush1.msra.mxu0 0.0
  %901 = vmatprep.subr.mxu0 0.0
  %902 = vmatpush1.msra.mxu0 0.0
  %903 = vmatprep.subr.mxu0 0.0
  %904 = vmatpush1.msra.mxu0 0.0
  %905 = vmatprep.subr.mxu0 0.0
  %906 = vmatpush1.msra.mxu0 0.0
  %907 = vmatprep.subr.mxu0 0.0
  %908 = vmatpush1.msra.mxu0 0.0
  %909 = vmatprep.subr.mxu0 0.0
  %910 = vmatpush1.msra.mxu0 0.0
  %911 = vmatprep.subr.mxu0 0.0
  %912 = vmatpush1.msra.mxu0 0.0
  %913 = vmatprep.subr.mxu0 0.0
  %914 = vmatpush1.msra.mxu0 0.0
  %915 = vmatprep.subr.mxu0 0.0
  %916 = vmatpush1.msra.mxu0 0.0
  %917 = vmatprep.subr.mxu0 0.0
  %918 = vmatpush1.msra.mxu0 0.0
  %919 = vmatprep.subr.mxu0 0.0
  %920 = vmatpush1.msra.mxu0 0.0
  %921 = vmatprep.subr.mxu0 0.0
  %922 = vmatpush1.msra.mxu0 0.0
  %923 = vmatprep.mubr.f32.mxu0 0.0
  %924 = vmatmul.mubr.f32.gmra.mrb[0].mxu0 %v855
  %v925 = vpop.f32.mrb[0].mxu0
  %v926 = vadd.f32 0.0, %v925
  %v927 = vpop.f32.mrb[0].mxu0
  %928 = vmatprep.mubr.f32.mxu0 0.0
  %929 = vmatmul.mubr.f32.gmra.mrb[0].mxu0 %v857
  %v930 = vpop.f32.mrb[0].mxu0
  %v931 = vadd.f32 0.0, %v930
  %v932 = vpop.f32.mrb[0].mxu0
  %933 = vdwg.mxu0
  %v934 = vadd.f32 %v848, %v926
  %v935 = vadd.f32 %v849, %v931
  %vm937 = vcmask 1041408
  %v938 = vrot.slane %v377, 6
  %v939 = vrot.slane %v382, 6
  %v940 = vsel %vm937, %v938, %v939
  %v941 = vsel %vm157, %v940, 0
  %v943 = vsel %vm157, %v939, 0
  %945 = vmatprep.subr.mxu0 0.0
  %946 = vmatpush1.msra.mxu0 %v412
  %947 = vmatprep.subr.mxu0 0.0
  %948 = vmatpush1.msra.mxu0 %v413
  %949 = vmatprep.subr.mxu0 0.0
  %950 = vmatpush1.msra.mxu0 0.0
  %951 = vmatprep.subr.mxu0 0.0
  %952 = vmatpush1.msra.mxu0 0.0
  %953 = vmatprep.subr.mxu0 0.0
  %954 = vmatpush1.msra.mxu0 0.0
  %955 = vmatprep.subr.mxu0 0.0
  %956 = vmatpush1.msra.mxu0 0.0
  %957 = vmatprep.subr.mxu0 0.0
  %958 = vmatpush1.msra.mxu0 0.0
  %959 = vmatprep.subr.mxu0 0.0
  %960 = vmatpush1.msra.mxu0 0.0
  %961 = vmatprep.subr.mxu0 0.0
  %962 = vmatpush1.msra.mxu0 0.0
  %963 = vmatprep.subr.mxu0 0.0
  %964 = vmatpush1.msra.mxu0 0.0
  %965 = vmatprep.subr.mxu0 0.0
  %966 = vmatpush1.msra.mxu0 0.0
  %967 = vmatprep.subr.mxu0 0.0
  %968 = vmatpush1.msra.mxu0 0.0
  %969 = vmatprep.subr.mxu0 0.0
  %970 = vmatpush1.msra.mxu0 0.0
  %971 = vmatprep.subr.mxu0 0.0
  %972 = vmatpush1.msra.mxu0 0.0
  %973 = vmatprep.subr.mxu0 0.0
  %974 = vmatpush1.msra.mxu0 0.0
  %975 = vmatprep.subr.mxu0 0.0
  %976 = vmatpush1.msra.mxu0 0.0
  %977 = vmatprep.subr.mxu0 0.0
  %978 = vmatpush1.msra.mxu0 0.0
  %979 = vmatprep.subr.mxu0 0.0
  %980 = vmatpush1.msra.mxu0 0.0
  %981 = vmatprep.subr.mxu0 0.0
  %982 = vmatpush1.msra.mxu0 0.0
  %983 = vmatprep.subr.mxu0 0.0
  %984 = vmatpush1.msra.mxu0 0.0
  %985 = vmatprep.subr.mxu0 0.0
  %986 = vmatpush1.msra.mxu0 0.0
  %987 = vmatprep.subr.mxu0 0.0
  %988 = vmatpush1.msra.mxu0 0.0
  %989 = vmatprep.subr.mxu0 0.0
  %990 = vmatpush1.msra.mxu0 0.0
  %991 = vmatprep.subr.mxu0 0.0
  %992 = vmatpush1.msra.mxu0 0.0
  %993 = vmatprep.subr.mxu0 0.0
  %994 = vmatpush1.msra.mxu0 0.0
  %995 = vmatprep.subr.mxu0 0.0
  %996 = vmatpush1.msra.mxu0 0.0
  %997 = vmatprep.subr.mxu0 0.0
  %998 = vmatpush1.msra.mxu0 0.0
  %999 = vmatprep.subr.mxu0 0.0
  %1000 = vmatpush1.msra.mxu0 0.0
  %1001 = vmatprep.subr.mxu0 0.0
  %1002 = vmatpush1.msra.mxu0 0.0
  %1003 = vmatprep.subr.mxu0 0.0
  %1004 = vmatpush1.msra.mxu0 0.0
  %1005 = vmatprep.subr.mxu0 0.0
  %1006 = vmatpush1.msra.mxu0 0.0
  %1007 = vmatprep.subr.mxu0 0.0
  %1008 = vmatpush1.msra.mxu0 0.0
  %1009 = vmatprep.mubr.f32.mxu0 0.0
  %1010 = vmatmul.mubr.f32.gmra.mrb[0].mxu0 %v941
  %v1011 = vpop.f32.mrb[0].mxu0
  %v1012 = vadd.f32 0.0, %v1011
  %v1013 = vpop.f32.mrb[0].mxu0
  %1014 = vmatprep.mubr.f32.mxu0 0.0
  %1015 = vmatmul.mubr.f32.gmra.mrb[0].mxu0 %v943
  %v1016 = vpop.f32.mrb[0].mxu0
  %v1017 = vadd.f32 0.0, %v1016
  %v1018 = vpop.f32.mrb[0].mxu0
  %1019 = vdwg.mxu0
  %v1020 = vadd.f32 %v934, %v1012
  %v1021 = vadd.f32 %v935, %v1017
  %v1023 = vrot.slane %v382, 7
  %v1024 = vrot.slane %v387, 7
  %v1025 = vsel %vm276, %v1023, %v1024
  %v1026 = vsel %vm157, %v1025, 0
  %v1028 = vsel %vm157, %v1024, 0
  %1030 = vmatprep.subr.mxu0 0.0
  %1031 = vmatpush1.msra.mxu0 %v414
  %1032 = vmatprep.subr.mxu0 0.0
  %1033 = vmatpush1.msra.mxu0 %v415
  %1034 = vmatprep.subr.mxu0 0.0
  %1035 = vmatpush1.msra.mxu0 0.0
  %1036 = vmatprep.subr.mxu0 0.0
  %1037 = vmatpush1.msra.mxu0 0.0
  %1038 = vmatprep.subr.mxu0 0.0
  %1039 = vmatpush1.msra.mxu0 0.0
  %1040 = vmatprep.subr.mxu0 0.0
  %1041 = vmatpush1.msra.mxu0 0.0
  %1042 = vmatprep.subr.mxu0 0.0
  %1043 = vmatpush1.msra.mxu0 0.0
  %1044 = vmatprep.subr.mxu0 0.0
  %1045 = vmatpush1.msra.mxu0 0.0
  %1046 = vmatprep.subr.mxu0 0.0
  %1047 = vmatpush1.msra.mxu0 0.0
  %1048 = vmatprep.subr.mxu0 0.0
  %1049 = vmatpush1.msra.mxu0 0.0
  %1050 = vmatprep.subr.mxu0 0.0
  %1051 = vmatpush1.msra.mxu0 0.0
  %1052 = vmatprep.subr.mxu0 0.0
  %1053 = vmatpush1.msra.mxu0 0.0
  %1054 = vmatprep.subr.mxu0 0.0
  %1055 = vmatpush1.msra.mxu0 0.0
  %1056 = vmatprep.subr.mxu0 0.0
  %1057 = vmatpush1.msra.mxu0 0.0
  %1058 = vmatprep.subr.mxu0 0.0
  %1059 = vmatpush1.msra.mxu0 0.0
  %1060 = vmatprep.subr.mxu0 0.0
  %1061 = vmatpush1.msra.mxu0 0.0
  %1062 = vmatprep.subr.mxu0 0.0
  %1063 = vmatpush1.msra.mxu0 0.0
  %1064 = vmatprep.subr.mxu0 0.0
  %1065 = vmatpush1.msra.mxu0 0.0
  %1066 = vmatprep.subr.mxu0 0.0
  %1067 = vmatpush1.msra.mxu0 0.0
  %1068 = vmatprep.subr.mxu0 0.0
  %1069 = vmatpush1.msra.mxu0 0.0
  %1070 = vmatprep.subr.mxu0 0.0
  %1071 = vmatpush1.msra.mxu0 0.0
  %1072 = vmatprep.subr.mxu0 0.0
  %1073 = vmatpush1.msra.mxu0 0.0
  %1074 = vmatprep.subr.mxu0 0.0
  %1075 = vmatpush1.msra.mxu0 0.0
  %1076 = vmatprep.subr.mxu0 0.0
  %1077 = vmatpush1.msra.mxu0 0.0
  %1078 = vmatprep.subr.mxu0 0.0
  %1079 = vmatpush1.msra.mxu0 0.0
  %1080 = vmatprep.subr.mxu0 0.0
  %1081 = vmatpush1.msra.mxu0 0.0
  %1082 = vmatprep.subr.mxu0 0.0
  %1083 = vmatpush1.msra.mxu0 0.0
  %1084 = vmatprep.subr.mxu0 0.0
  %1085 = vmatpush1.msra.mxu0 0.0
  %1086 = vmatprep.subr.mxu0 0.0
  %1087 = vmatpush1.msra.mxu0 0.0
  %1088 = vmatprep.subr.mxu0 0.0
  %1089 = vmatpush1.msra.mxu0 0.0
  %1090 = vmatprep.subr.mxu0 0.0
  %1091 = vmatpush1.msra.mxu0 0.0
  %1092 = vmatprep.subr.mxu0 0.0
  %1093 = vmatpush1.msra.mxu0 0.0
  %1094 = vmatprep.mubr.f32.mxu0 0.0
  %1095 = vmatmul.mubr.f32.gmra.mrb[0].mxu0 %v1026
  %v1096 = vpop.f32.mrb[0].mxu0
  %v1097 = vadd.f32 0.0, %v1096
  %v1098 = vpop.f32.mrb[0].mxu0
  %1099 = vmatprep.mubr.f32.mxu0 0.0
  %1100 = vmatmul.mubr.f32.gmra.mrb[0].mxu0 %v1028
  %v1101 = vpop.f32.mrb[0].mxu0
  %v1102 = vadd.f32 0.0, %v1101
  %v1103 = vpop.f32.mrb[0].mxu0
  %1104 = vdwg.mxu0
  %v1105 = vadd.f32 %v1020, %v1097
  %v1106 = vadd.f32 %v1021, %v1102
  %v1108 = vsel %vm157, %v392, 0
  %v1111 = vsel %vm157, %v397, 0
  %1113 = vmatprep.subr.mxu0 0.0
  %1114 = vmatpush1.msra.mxu0 %v416
  %1115 = vmatprep.subr.mxu0 0.0
  %1116 = vmatpush1.msra.mxu0 %v417
  %1117 = vmatprep.subr.mxu0 0.0
  %1118 = vmatpush1.msra.mxu0 0.0
  %1119 = vmatprep.subr.mxu0 0.0
  %1120 = vmatpush1.msra.mxu0 0.0
  %1121 = vmatprep.subr.mxu0 0.0
  %1122 = vmatpush1.msra.mxu0 0.0
  %1123 = vmatprep.subr.mxu0 0.0
  %1124 = vmatpush1.msra.mxu0 0.0
  %1125 = vmatprep.subr.mxu0 0.0
  %1126 = vmatpush1.msra.mxu0 0.0
  %1127 = vmatprep.subr.mxu0 0.0
  %1128 = vmatpush1.msra.mxu0 0.0
  %1129 = vmatprep.subr.mxu0 0.0
  %1130 = vmatpush1.msra.mxu0 0.0
  %1131 = vmatprep.subr.mxu0 0.0
  %1132 = vmatpush1.msra.mxu0 0.0
  %1133 = vmatprep.subr.mxu0 0.0
  %1134 = vmatpush1.msra.mxu0 0.0
  %1135 = vmatprep.subr.mxu0 0.0
  %1136 = vmatpush1.msra.mxu0 0.0
  %1137 = vmatprep.subr.mxu0 0.0
  %1138 = vmatpush1.msra.mxu0 0.0
  %1139 = vmatprep.subr.mxu0 0.0
  %1140 = vmatpush1.msra.mxu0 0.0
  %1141 = vmatprep.subr.mxu0 0.0
  %1142 = vmatpush1.msra.mxu0 0.0
  %1143 = vmatprep.subr.mxu0 0.0
  %1144 = vmatpush1.msra.mxu0 0.0
  %1145 = vmatprep.subr.mxu0 0.0
  %1146 = vmatpush1.msra.mxu0 0.0
  %1147 = vmatprep.subr.mxu0 0.0
  %1148 = vmatpush1.msra.mxu0 0.0
  %1149 = vmatprep.subr.mxu0 0.0
  %1150 = vmatpush1.msra.mxu0 0.0
  %1151 = vmatprep.subr.mxu0 0.0
  %1152 = vmatpush1.msra.mxu0 0.0
  %1153 = vmatprep.subr.mxu0 0.0
  %1154 = vmatpush1.msra.mxu0 0.0
  %1155 = vmatprep.subr.mxu0 0.0
  %1156 = vmatpush1.msra.mxu0 0.0
  %1157 = vmatprep.subr.mxu0 0.0
  %1158 = vmatpush1.msra.mxu0 0.0
  %1159 = vmatprep.subr.mxu0 0.0
  %1160 = vmatpush1.msra.mxu0 0.0
  %1161 = vmatprep.subr.mxu0 0.0
  %1162 = vmatpush1.msra.mxu0 0.0
  %1163 = vmatprep.subr.mxu0 0.0
  %1164 = vmatpush1.msra.mxu0 0.0
  %1165 = vmatprep.subr.mxu0 0.0
  %1166 = vmatpush1.msra.mxu0 0.0
  %1167 = vmatprep.subr.mxu0 0.0
  %1168 = vmatpush1.msra.mxu0 0.0
  %1169 = vmatprep.subr.mxu0 0.0
  %1170 = vmatpush1.msra.mxu0 0.0
  %1171 = vmatprep.subr.mxu0 0.0
  %1172 = vmatpush1.msra.mxu0 0.0
  %1173 = vmatprep.subr.mxu0 0.0
  %1174 = vmatpush1.msra.mxu0 0.0
  %1175 = vmatprep.subr.mxu0 0.0
  %1176 = vmatpush1.msra.mxu0 0.0
  %1177 = vmatprep.mubr.f32.mxu0 0.0
  %1178 = vmatmul.mubr.f32.gmra.mrb[0].mxu0 %v1108
  %v1179 = vpop.f32.mrb[0].mxu0
  %v1180 = vadd.f32 0.0, %v1179
  %v1181 = vpop.f32.mrb[0].mxu0
  %1182 = vmatprep.mubr.f32.mxu0 0.0
  %1183 = vmatmul.mubr.f32.gmra.mrb[0].mxu0 %v1111
  %v1184 = vpop.f32.mrb[0].mxu0
  %v1185 = vadd.f32 0.0, %v1184
  %v1186 = vpop.f32.mrb[0].mxu0
  %1187 = vdwg.mxu0
  %v1188 = vadd.f32 %v1105, %v1180
  %v1189 = vadd.f32 %v1106, %v1185
  %vm1190 = vcmask 261120
  %v1191 = vsel %vm1190, %v1188, 0.0
  %vm1192 = vcmask 253952
  %v1193 = vsel %vm1192, %v1189, 0.0
  %v1194 = vadd.f32 %v1191, %v1193
  %v1195 = vrot.slane %v1194, 4
  %v1196 = vadd.f32 %v1194, %v1195
  %v1197 = vrot.slane %v1196, 2
  %v1198 = vadd.f32 %v1196, %v1197
  %v1199 = vrot.slane %v1198, 1
  %v1200 = vadd.f32 %v1198, %v1199
  %v1201 = vmul.f32 %v1200, 0.11111111
  %v1202 = vmul.f32 %v1188, %v1188
  %v1203 = vmul.f32 %v1189, %v1189
  %v1204 = vsel %vm1190, %v1202, 0.0
  %v1205 = vsel %vm1192, %v1203, 0.0
  %v1206 = vadd.f32 %v1204, %v1205
  %v1207 = vrot.slane %v1206, 4
  %v1208 = vadd.f32 %v1206, %v1207
  %v1209 = vrot.slane %v1208, 2
  %v1210 = vadd.f32 %v1208, %v1209
  %v1211 = vrot.slane %v1210, 1
  %v1212 = vadd.f32 %v1210, %v1211
  %v1213 = vmul.f32 %v1212, 0.11111111
  %v1214 = vmul.f32 %v1201, %v1201
  %v1215 = vsub.f32 %v1213, %v1214
  %v1216 = vsub.f32 %v1188, %v1201
  %v1217 = vsub.f32 %v1189, %v1201
  %v1218 = vadd.f32 %v1215, 1e-05
  %v1219 = vrsqrt.pop %v1218
  %v1220 = vmul.f32 %v1216, %v1219
  %v1221 = vmul.f32 %v1217, %v1219
  %v1222 = vmax.f32 %v1220, 0.0
  %v1223 = vmax.f32 %v1221, 0.0
  %v1224 = vld [vmem:[%s2] sm:$0xff]
  %v1225 = vld [vmem:[%s2 + $0x8] sm:$0xff]
  %v1226 = vld [vmem:[%s2 + $0x10] sm:$0xff]
  %v1227 = vld [vmem:[%s2 + $0x18] sm:$0xff]
  %v1228 = vld [vmem:[%s2 + $0x20] sm:$0xff]
  %v1229 = vld [vmem:[%s2 + $0x28] sm:$0xff]
  %v1230 = vld [vmem:[%s2 + $0x30] sm:$0xff]
  %v1231 = vld [vmem:[%s2 + $0x38] sm:$0xff]
  %v1232 = vld [vmem:[%s2 + $0x40] sm:$0xff]
  %v1233 = vld [vmem:[%s2 + $0x48] sm:$0xff]
  %v1234 = vld [vmem:[%s2 + $0x50] sm:$0xff]
  %v1235 = vld [vmem:[%s2 + $0x58] sm:$0xff]
  %v1236 = vld [vmem:[%s2 + $0x60] sm:$0xff]
  %v1237 = vld [vmem:[%s2 + $0x68] sm:$0xff]
  %v1238 = vld [vmem:[%s2 + $0x70] sm:$0xff]
  %v1239 = vld [vmem:[%s2 + $0x78] sm:$0xff]
  %v1240 = vld [vmem:[%s2 + $0x80] sm:$0xff]
  %v1241 = vld [vmem:[%s2 + $0x88] sm:$0xff]
  %v1242 = vld [vmem:[%s2 + $0x90] sm:$0xff]
  %v1243 = vld [vmem:[%s2 + $0x98] sm:$0xff]
  %v1244 = vld [vmem:[%s2 + $0xa0] sm:$0xff]
  %v1245 = vld [vmem:[%s2 + $0xa8] sm:$0xff]
  %v1246 = vld [vmem:[%s2 + $0xb0] sm:$0xff]
  %v1247 = vld [vmem:[%s2 + $0xb8] sm:$0xff]
  %s1248 = scalar_lea.vmem %s2, 192
  %v1249 = vld [vmem:[%s1248] ss:$8 sm:$0x3]
  %v1251 = vsel %vm1190, %v1222, 0
  %1253 = vmatprep.subr.mxu0 %v1225
  %1254 = vmatpush1.msra.mxu0 %v1224
  %1255 = vmatprep.subr.mxu0 %v1227
  %1256 = vmatpush1.msra.mxu0 %v1226
  %1257 = vmatprep.subr.mxu0 %v1229
  %1258 = vmatpush1.msra.mxu0 %v1228
  %1259 = vmatprep.subr.mxu0 %v1231
  %1260 = vmatpush1.msra.mxu0 %v1230
  %1261 = vmatprep.subr.mxu0 0.0
  %1262 = vmatpush1.msra.mxu0 0.0
  %1263 = vmatprep.subr.mxu0 0.0
  %1264 = vmatpush1.msra.mxu0 0.0
  %1265 = vmatprep.subr.mxu0 0.0
  %1266 = vmatpush1.msra.mxu0 0.0
  %1267 = vmatprep.subr.mxu0 0.0
  %1268 = vmatpush1.msra.mxu0 0.0
  %1269 = vmatprep.subr.mxu0 0.0
  %1270 = vmatpush1.msra.mxu0 0.0
  %1271 = vmatprep.subr.mxu0 0.0
  %1272 = vmatpush1.msra.mxu0 0.0
  %1273 = vmatprep.subr.mxu0 0.0
  %1274 = vmatpush1.msra.mxu0 0.0
  %1275 = vmatprep.subr.mxu0 0.0
  %1276 = vmatpush1.msra.mxu0 0.0
  %1277 = vmatprep.subr.mxu0 0.0
  %1278 = vmatpush1.msra.mxu0 0.0
  %1279 = vmatprep.subr.mxu0 0.0
  %1280 = vmatpush1.msra.mxu0 0.0
  %1281 = vmatprep.subr.mxu0 0.0
  %1282 = vmatpush1.msra.mxu0 0.0
  %1283 = vmatprep.subr.mxu0 0.0
  %1284 = vmatpush1.msra.mxu0 0.0
  %1285 = vmatprep.subr.mxu0 0.0
  %1286 = vmatpush1.msra.mxu0 0.0
  %1287 = vmatprep.subr.mxu0 0.0
  %1288 = vmatpush1.msra.mxu0 0.0
  %1289 = vmatprep.subr.mxu0 0.0
  %1290 = vmatpush1.msra.mxu0 0.0
  %1291 = vmatprep.subr.mxu0 0.0
  %1292 = vmatpush1.msra.mxu0 0.0
  %1293 = vmatprep.subr.mxu0 0.0
  %1294 = vmatpush1.msra.mxu0 0.0
  %1295 = vmatprep.subr.mxu0 0.0
  %1296 = vmatpush1.msra.mxu0 0.0
  %1297 = vmatprep.subr.mxu0 0.0
  %1298 = vmatpush1.msra.mxu0 0.0
  %1299 = vmatprep.subr.mxu0 0.0
  %1300 = vmatpush1.msra.mxu0 0.0
  %1301 = vmatprep.subr.mxu0 0.0
  %1302 = vmatpush1.msra.mxu0 0.0
  %1303 = vmatprep.subr.mxu0 0.0
  %1304 = vmatpush1.msra.mxu0 0.0
  %1305 = vmatprep.subr.mxu0 0.0
  %1306 = vmatpush1.msra.mxu0 0.0
  %1307 = vmatprep.subr.mxu0 0.0
  %1308 = vmatpush1.msra.mxu0 0.0
  %1309 = vmatprep.subr.mxu0 0.0
  %1310 = vmatpush1.msra.mxu0 0.0
  %1311 = vmatprep.subr.mxu0 0.0
  %1312 = vmatpush1.msra.mxu0 0.0
  %1313 = vmatprep.subr.mxu0 0.0
  %1314 = vmatpush1.msra.mxu0 0.0
  %1315 = vmatprep.subr.mxu0 0.0
  %1316 = vmatpush1.msra.mxu0 0.0
  %1317 = vmatprep.mubr.f32.mxu0 0.0
  %1318 = vmatmul.mubr.f32.gmra.mrb[0].mxu0 %v1251
  %v1319 = vpop.f32.mrb[0].mxu0
  %v1320 = vadd.f32 0.0, %v1319
  %v1321 = vpop.f32.mrb[0].mxu0
  %v1322 = vadd.f32 0.0, %v1321
  %1323 = vdwg.mxu0
  %v1325 = vlaneseq
  %v1326 = vshrl.u32 %v1325, 7
  %v1327 = vsub.s32 0, %v1326
  %v1328 = vrot.slane %v1249, %v1327
  %v1329 = vlaneseq
  %v1330 = vshrl.u32 %v1329, 7
  %v1331 = vsub.s32 1, %v1330
  %v1332 = vrot.slane %v1249, %v1331
  %v1335 = vadd.f32 %v1328, %v1320
  %v1336 = vadd.f32 %v1332, %v1322
  %v1337 = vrot.slane %v1222, 3
  %v1338 = vsel %vm1190, %v1337, 0
  %1340 = vmatprep.subr.mxu0 %v1233
  %1341 = vmatpush1.msra.mxu0 %v1232
  %1342 = vmatprep.subr.mxu0 %v1235
  %1343 = vmatpush1.msra.mxu0 %v1234
  %1344 = vmatprep.subr.mxu0 %v1237
  %1345 = vmatpush1.msra.mxu0 %v1236
  %1346 = vmatprep.subr.mxu0 %v1239
  %1347 = vmatpush1.msra.mxu0 %v1238
  %1348 = vmatprep.subr.mxu0 0.0
  %1349 = vmatpush1.msra.mxu0 0.0
  %1350 = vmatprep.subr.mxu0 0.0
  %1351 = vmatpush1.msra.mxu0 0.0
  %1352 = vmatprep.subr.mxu0 0.0
  %1353 = vmatpush1.msra.mxu0 0.0
  %1354 = vmatprep.subr.mxu0 0.0
  %1355 = vmatpush1.msra.mxu0 0.0
  %1356 = vmatprep.subr.mxu0 0.0
  %1357 = vmatpush1.msra.mxu0 0.0
  %1358 = vmatprep.subr.mxu0 0.0
  %1359 = vmatpush1.msra.mxu0 0.0
  %1360 = vmatprep.subr.mxu0 0.0
  %1361 = vmatpush1.msra.mxu0 0.0
  %1362 = vmatprep.subr.mxu0 0.0
  %1363 = vmatpush1.msra.mxu0 0.0
  %1364 = vmatprep.subr.mxu0 0.0
  %1365 = vmatpush1.msra.mxu0 0.0
  %1366 = vmatprep.subr.mxu0 0.0
  %1367 = vmatpush1.msra.mxu0 0.0
  %1368 = vmatprep.subr.mxu0 0.0
  %1369 = vmatpush1.msra.mxu0 0.0
  %1370 = vmatprep.subr.mxu0 0.0
  %1371 = vmatpush1.msra.mxu0 0.0
  %1372 = vmatprep.subr.mxu0 0.0
  %1373 = vmatpush1.msra.mxu0 0.0
  %1374 = vmatprep.subr.mxu0 0.0
  %1375 = vmatpush1.msra.mxu0 0.0
  %1376 = vmatprep.subr.mxu0 0.0
  %1377 = vmatpush1.msra.mxu0 0.0
  %1378 = vmatprep.subr.mxu0 0.0
  %1379 = vmatpush1.msra.mxu0 0.0
  %1380 = vmatprep.subr.mxu0 0.0
  %1381 = vmatpush1.msra.mxu0 0.0
  %1382 = vmatprep.subr.mxu0 0.0
  %1383 = vmatpush1.msra.mxu0 0.0
  %1384 = vmatprep.subr.mxu0 0.0
  %1385 = vmatpush1.msra.mxu0 0.0
  %1386 = vmatprep.subr.mxu0 0.0
  %1387 = vmatpush1.msra.mxu0 0.0
  %1388 = vmatprep.subr.mxu0 0.0
  %1389 = vmatpush1.msra.mxu0 0.0
  %1390 = vmatprep.subr.mxu0 0.0
  %1391 = vmatpush1.msra.mxu0 0.0
  %1392 = vmatprep.subr.mxu0 0.0
  %1393 = vmatpush1.msra.mxu0 0.0
  %1394 = vmatprep.subr.mxu0 0.0
  %1395 = vmatpush1.msra.mxu0 0.0
  %1396 = vmatprep.subr.mxu0 0.0
  %1397 = vmatpush1.msra.mxu0 0.0
  %1398 = vmatprep.subr.mxu0 0.0
  %1399 = vmatpush1.msra.mxu0 0.0
  %1400 = vmatprep.subr.mxu0 0.0
  %1401 = vmatpush1.msra.mxu0 0.0
  %1402 = vmatprep.subr.mxu0 0.0
  %1403 = vmatpush1.msra.mxu0 0.0
  %1404 = vmatprep.mubr.f32.mxu0 0.0
  %1405 = vmatmul.mubr.f32.gmra.mrb[0].mxu0 %v1338
  %v1406 = vpop.f32.mrb[0].mxu0
  %v1407 = vadd.f32 0.0, %v1406
  %v1408 = vpop.f32.mrb[0].mxu0
  %v1409 = vadd.f32 0.0, %v1408
  %1410 = vdwg.mxu0
  %v1411 = vadd.f32 %v1335, %v1407
  %v1412 = vadd.f32 %v1336, %v1409
  %v1414 = vrot.slane %v1222, 6
  %v1415 = vrot.slane %v1223, 6
  %v1416 = vsel %vm937, %v1414, %v1415
  %v1417 = vsel %vm1190, %v1416, 0
  %1419 = vmatprep.subr.mxu0 %v1241
  %1420 = vmatpush1.msra.mxu0 %v1240
  %1421 = vmatprep.subr.mxu0 %v1243
  %1422 = vmatpush1.msra.mxu0 %v1242
  %1423 = vmatprep.subr.mxu0 %v1245
  %1424 = vmatpush1.msra.mxu0 %v1244
  %1425 = vmatprep.subr.mxu0 %v1247
  %1426 = vmatpush1.msra.mxu0 %v1246
  %1427 = vmatprep.subr.mxu0 0.0
  %1428 = vmatpush1.msra.mxu0 0.0
  %1429 = vmatprep.subr.mxu0 0.0
  %1430 = vmatpush1.msra.mxu0 0.0
  %1431 = vmatprep.subr.mxu0 0.0
  %1432 = vmatpush1.msra.mxu0 0.0
  %1433 = vmatprep.subr.mxu0 0.0
  %1434 = vmatpush1.msra.mxu0 0.0
  %1435 = vmatprep.subr.mxu0 0.0
  %1436 = vmatpush1.msra.mxu0 0.0
  %1437 = vmatprep.subr.mxu0 0.0
  %1438 = vmatpush1.msra.mxu0 0.0
  %1439 = vmatprep.subr.mxu0 0.0
  %1440 = vmatpush1.msra.mxu0 0.0
  %1441 = vmatprep.subr.mxu0 0.0
  %1442 = vmatpush1.msra.mxu0 0.0
  %1443 = vmatprep.subr.mxu0 0.0
  %1444 = vmatpush1.msra.mxu0 0.0
  %1445 = vmatprep.subr.mxu0 0.0
  %1446 = vmatpush1.msra.mxu0 0.0
  %1447 = vmatprep.subr.mxu0 0.0
  %1448 = vmatpush1.msra.mxu0 0.0
  %1449 = vmatprep.subr.mxu0 0.0
  %1450 = vmatpush1.msra.mxu0 0.0
  %1451 = vmatprep.subr.mxu0 0.0
  %1452 = vmatpush1.msra.mxu0 0.0
  %1453 = vmatprep.subr.mxu0 0.0
  %1454 = vmatpush1.msra.mxu0 0.0
  %1455 = vmatprep.subr.mxu0 0.0
  %1456 = vmatpush1.msra.mxu0 0.0
  %1457 = vmatprep.subr.mxu0 0.0
  %1458 = vmatpush1.msra.mxu0 0.0
  %1459 = vmatprep.subr.mxu0 0.0
  %1460 = vmatpush1.msra.mxu0 0.0
  %1461 = vmatprep.subr.mxu0 0.0
  %1462 = vmatpush1.msra.mxu0 0.0
  %1463 = vmatprep.subr.mxu0 0.0
  %1464 = vmatpush1.msra.mxu0 0.0
  %1465 = vmatprep.subr.mxu0 0.0
  %1466 = vmatpush1.msra.mxu0 0.0
  %1467 = vmatprep.subr.mxu0 0.0
  %1468 = vmatpush1.msra.mxu0 0.0
  %1469 = vmatprep.subr.mxu0 0.0
  %1470 = vmatpush1.msra.mxu0 0.0
  %1471 = vmatprep.subr.mxu0 0.0
  %1472 = vmatpush1.msra.mxu0 0.0
  %1473 = vmatprep.subr.mxu0 0.0
  %1474 = vmatpush1.msra.mxu0 0.0
  %1475 = vmatprep.subr.mxu0 0.0
  %1476 = vmatpush1.msra.mxu0 0.0
  %1477 = vmatprep.subr.mxu0 0.0
  %1478 = vmatpush1.msra.mxu0 0.0
  %1479 = vmatprep.subr.mxu0 0.0
  %1480 = vmatpush1.msra.mxu0 0.0
  %1481 = vmatprep.subr.mxu0 0.0
  %1482 = vmatpush1.msra.mxu0 0.0
  %1483 = vmatprep.mubr.f32.mxu0 0.0
  %1484 = vmatmul.mubr.f32.gmra.mrb[0].mxu0 %v1417
  %v1485 = vpop.f32.mrb[0].mxu0
  %v1486 = vadd.f32 0.0, %v1485
  %v1487 = vpop.f32.mrb[0].mxu0
  %v1488 = vadd.f32 0.0, %v1487
  %1489 = vdwg.mxu0
  %v1490 = vadd.f32 %v1411, %v1486
  %v1491 = vadd.f32 %v1412, %v1488
  %s1492 = scalar_lea.vmem %s2, 352
  %v1493 = vld [vmem:[%s1492] ss:$8 sm:$0x3]
  %vm1494 = vcmp.gt.f32.partialorder %v1493, 0.5
  %v1497 = vcombine.low %v1490, %v1491
  %v1499 = vunpack.c.l.s4 1966171168
  %v1500 = vunpack.c.0.s8 %v1499
  %v1501 = vlaneseq
  %v1502 = vshrl.u32 %v1501, 7
  %v1503 = vsub.s32 %v1500, %v1502
  %v1504 = vrot.slane %v1497, %v1503
  %v1506 = vunpack.c.l.s4 1966171168
  %v1507 = vunpack.c.0.s8 %v1506
  %v1508 = vlaneseq
  %v1509 = vshrl.u32 %v1508, 7
  %v1510 = vsub.s32 %v1507, %v1509
  %v1511 = vrot.slane %v1504, %v1510
  %v1513 = vcombine.high %v1511, %v1511
  %v1515 = vsel %vm1494, %v1511, %v1513
  %v1516 = vsel %vm1494, %v1513, %v1511
  %v1517 = vld [vmem:[%s2 + $0xd0] sm:$0xff]
  %v1518 = vld [vmem:[%s2 + $0xd8] sm:$0xff]
  %v1519 = vld [vmem:[%s2 + $0xe0] sm:$0xff]
  %v1520 = vld [vmem:[%s2 + $0xe8] sm:$0xff]
  %v1521 = vld [vmem:[%s2 + $0xf0] sm:$0xff]
  %v1522 = vld [vmem:[%s2 + $0xf8] sm:$0xff]
  %v1523 = vld [vmem:[%s2 + $0x100] sm:$0xff]
  %v1524 = vld [vmem:[%s2 + $0x108] sm:$0xff]
  %v1525 = vld [vmem:[%s2 + $0x110] sm:$0xff]
  %v1526 = vld [vmem:[%s2 + $0x118] sm:$0xff]
  %v1527 = vld [vmem:[%s2 + $0x120] sm:$0xff]
  %v1528 = vld [vmem:[%s2 + $0x128] sm:$0xff]
  %v1529 = vld [vmem:[%s2 + $0x130] sm:$0xff]
  %v1530 = vld [vmem:[%s2 + $0x138] sm:$0xff]
  %v1531 = vld [vmem:[%s2 + $0x140] sm:$0xff]
  %v1532 = vld [vmem:[%s2 + $0x148] sm:$0xff]
  %v1533 = vld [vmem:[%s2 + $0x150] ss:$0 sm:$0xff]
  %vm1534 = vcmask 523264
  %v1536 = vsel %vm1534, 0.0, 0
  %1538 = vmatprep.subr.mxu0 %v1518
  %1539 = vmatpush1.msra.mxu0 %v1517
  %1540 = vmatprep.subr.mxu0 %v1520
  %1541 = vmatpush1.msra.mxu0 %v1519
  %1542 = vmatprep.subr.mxu0 %v1522
  %1543 = vmatpush1.msra.mxu0 %v1521
  %1544 = vmatprep.subr.mxu0 %v1524
  %1545 = vmatpush1.msra.mxu0 %v1523
  %1546 = vmatprep.subr.mxu0 %v1526
  %1547 = vmatpush1.msra.mxu0 %v1525
  %1548 = vmatprep.subr.mxu0 %v1528
  %1549 = vmatpush1.msra.mxu0 %v1527
  %1550 = vmatprep.subr.mxu0 %v1530
  %1551 = vmatpush1.msra.mxu0 %v1529
  %1552 = vmatprep.subr.mxu0 %v1532
  %1553 = vmatpush1.msra.mxu0 %v1531
  %1554 = vmatprep.subr.mxu0 0.0
  %1555 = vmatpush1.msra.mxu0 0.0
  %1556 = vmatprep.subr.mxu0 0.0
  %1557 = vmatpush1.msra.mxu0 0.0
  %1558 = vmatprep.subr.mxu0 0.0
  %1559 = vmatpush1.msra.mxu0 0.0
  %1560 = vmatprep.subr.mxu0 0.0
  %1561 = vmatpush1.msra.mxu0 0.0
  %1562 = vmatprep.subr.mxu0 0.0
  %1563 = vmatpush1.msra.mxu0 0.0
  %1564 = vmatprep.subr.mxu0 0.0
  %1565 = vmatpush1.msra.mxu0 0.0
  %1566 = vmatprep.subr.mxu0 0.0
  %1567 = vmatpush1.msra.mxu0 0.0
  %1568 = vmatprep.subr.mxu0 0.0
  %1569 = vmatpush1.msra.mxu0 0.0
  %1570 = vmatprep.subr.mxu0 0.0
  %1571 = vmatpush1.msra.mxu0 0.0
  %1572 = vmatprep.subr.mxu0 0.0
  %1573 = vmatpush1.msra.mxu0 0.0
  %1574 = vmatprep.subr.mxu0 0.0
  %1575 = vmatpush1.msra.mxu0 0.0
  %1576 = vmatprep.subr.mxu0 0.0
  %1577 = vmatpush1.msra.mxu0 0.0
  %1578 = vmatprep.subr.mxu0 0.0
  %1579 = vmatpush1.msra.mxu0 0.0
  %1580 = vmatprep.subr.mxu0 0.0
  %1581 = vmatpush1.msra.mxu0 0.0
  %1582 = vmatprep.subr.mxu0 0.0
  %1583 = vmatpush1.msra.mxu0 0.0
  %1584 = vmatprep.subr.mxu0 0.0
  %1585 = vmatpush1.msra.mxu0 0.0
  %1586 = vmatprep.subr.mxu0 0.0
  %1587 = vmatpush1.msra.mxu0 0.0
  %1588 = vmatprep.subr.mxu0 0.0
  %1589 = vmatpush1.msra.mxu0 0.0
  %1590 = vmatprep.subr.mxu0 0.0
  %1591 = vmatpush1.msra.mxu0 0.0
  %1592 = vmatprep.subr.mxu0 0.0
  %1593 = vmatpush1.msra.mxu0 0.0
  %1594 = vmatprep.subr.mxu0 0.0
  %1595 = vmatpush1.msra.mxu0 0.0
  %1596 = vmatprep.subr.mxu0 0.0
  %1597 = vmatpush1.msra.mxu0 0.0
  %1598 = vmatprep.subr.mxu0 0.0
  %1599 = vmatpush1.msra.mxu0 0.0
  %1600 = vmatprep.subr.mxu0 0.0
  %1601 = vmatpush1.msra.mxu0 0.0
  %1602 = vmatprep.mubr.f32.mxu0 0.0
  %1603 = vmatmul.mubr.f32.gmra.mrb[0].mxu0 %v1536
  %v1604 = vpop.f32.mrb[0].mxu0
  %v1605 = vadd.f32 0.0, %v1604
  %v1606 = vpop.f32.mrb[0].mxu0
  %v1607 = vadd.f32 0.0, %v1606
  %1608 = vdwg.mxu0
  %v1609 = vadd.f32 %v1515, %v1605
  %v1610 = vxor.u32 %v1609, 2147483648
  %v1611 = vmul.f32 %v1610, 1.442695
  %v1612 = vpow.pop %v1611
  %v1613 = vadd.f32 %v1612, 1.0
  %v1614 = vrcp.pop %v1613
  %v1615 = vmul.f32 1.0, %v1614
  %v1616 = vadd.f32 %v1607, %v1533
  %v1617 = vmul.f32 %v1615, %v1616
  %v1619 = vrot.slane %v1515, 1
  %v1621 = vadd.f32 %v1619, %v1617
  %v1622 = vtanh.pop %v1621
  %v1623 = vsub.f32 1.0, %v1615
  %1625 = vrot.lane.b32.xlu0 %v1622, 64
  %v1626 = vpop.permute.xlu0 %1625
  %v1628 = vmul.f32 %v1623, %v1626
  %v1629 = vmul.f32 %v1615, 0.0
  %v1630 = vadd.f32 %v1628, %v1629
  %v1632 = vlaneseq
  %v1633 = vshrl.u32 %v1632, 7
  %v1634 = vsub.s32 0, %v1633
  %v1635 = vrot.slane %v1630, %v1634
  %1636 = vrot.lane.b32.xlu0 %v1635, 64
  %v1637 = vpop.permute.xlu0 %1636
  %v1638 = vsel %vm1534, %v1637, 0
  %1640 = vmatprep.subr.mxu0 %v1518
  %1641 = vmatpush1.msra.mxu0 %v1517
  %1642 = vmatprep.subr.mxu0 %v1520
  %1643 = vmatpush1.msra.mxu0 %v1519
  %1644 = vmatprep.subr.mxu0 %v1522
  %1645 = vmatpush1.msra.mxu0 %v1521
  %1646 = vmatprep.subr.mxu0 %v1524
  %1647 = vmatpush1.msra.mxu0 %v1523
  %1648 = vmatprep.subr.mxu0 %v1526
  %1649 = vmatpush1.msra.mxu0 %v1525
  %1650 = vmatprep.subr.mxu0 %v1528
  %1651 = vmatpush1.msra.mxu0 %v1527
  %1652 = vmatprep.subr.mxu0 %v1530
  %1653 = vmatpush1.msra.mxu0 %v1529
  %1654 = vmatprep.subr.mxu0 %v1532
  %1655 = vmatpush1.msra.mxu0 %v1531
  %1656 = vmatprep.subr.mxu0 0.0
  %1657 = vmatpush1.msra.mxu0 0.0
  %1658 = vmatprep.subr.mxu0 0.0
  %1659 = vmatpush1.msra.mxu0 0.0
  %1660 = vmatprep.subr.mxu0 0.0
  %1661 = vmatpush1.msra.mxu0 0.0
  %1662 = vmatprep.subr.mxu0 0.0
  %1663 = vmatpush1.msra.mxu0 0.0
  %1664 = vmatprep.subr.mxu0 0.0
  %1665 = vmatpush1.msra.mxu0 0.0
  %1666 = vmatprep.subr.mxu0 0.0
  %1667 = vmatpush1.msra.mxu0 0.0
  %1668 = vmatprep.subr.mxu0 0.0
  %1669 = vmatpush1.msra.mxu0 0.0
  %1670 = vmatprep.subr.mxu0 0.0
  %1671 = vmatpush1.msra.mxu0 0.0
  %1672 = vmatprep.subr.mxu0 0.0
  %1673 = vmatpush1.msra.mxu0 0.0
  %1674 = vmatprep.subr.mxu0 0.0
  %1675 = vmatpush1.msra.mxu0 0.0
  %1676 = vmatprep.subr.mxu0 0.0
  %1677 = vmatpush1.msra.mxu0 0.0
  %1678 = vmatprep.subr.mxu0 0.0
  %1679 = vmatpush1.msra.mxu0 0.0
  %1680 = vmatprep.subr.mxu0 0.0
  %1681 = vmatpush1.msra.mxu0 0.0
  %1682 = vmatprep.subr.mxu0 0.0
  %1683 = vmatpush1.msra.mxu0 0.0
  %1684 = vmatprep.subr.mxu0 0.0
  %1685 = vmatpush1.msra.mxu0 0.0
  %1686 = vmatprep.subr.mxu0 0.0
  %1687 = vmatpush1.msra.mxu0 0.0
  %1688 = vmatprep.subr.mxu0 0.0
  %1689 = vmatpush1.msra.mxu0 0.0
  %1690 = vmatprep.subr.mxu0 0.0
  %1691 = vmatpush1.msra.mxu0 0.0
  %1692 = vmatprep.subr.mxu0 0.0
  %1693 = vmatpush1.msra.mxu0 0.0
  %1694 = vmatprep.subr.mxu0 0.0
  %1695 = vmatpush1.msra.mxu0 0.0
  %1696 = vmatprep.subr.mxu0 0.0
  %1697 = vmatpush1.msra.mxu0 0.0
  %1698 = vmatprep.subr.mxu0 0.0
  %1699 = vmatpush1.msra.mxu0 0.0
  %1700 = vmatprep.subr.mxu0 0.0
  %1701 = vmatpush1.msra.mxu0 0.0
  %1702 = vmatprep.subr.mxu0 0.0
  %1703 = vmatpush1.msra.mxu0 0.0
  %1704 = vmatprep.mubr.f32.mxu0 0.0
  %1705 = vmatmul.mubr.f32.gmra.mrb[0].mxu0 %v1638
  %v1706 = vpop.f32.mrb[0].mxu0
  %v1707 = vadd.f32 0.0, %v1706
  %v1708 = vpop.f32.mrb[0].mxu0
  %v1709 = vadd.f32 0.0, %v1708
  %1710 = vdwg.mxu0
  %v1712 = vrot.slane %v1707, 7
  %v1714 = vadd.f32 %v1490, %v1712
  %v1715 = vxor.u32 %v1714, 2147483648
  %v1716 = vmul.f32 %v1715, 1.442695
  %v1717 = vpow.pop %v1716
  %v1718 = vadd.f32 %v1717, 1.0
  %v1719 = vrcp.pop %v1718
  %v1720 = vmul.f32 1.0, %v1719
  %v1721 = vadd.f32 %v1709, %v1533
  %v1723 = vrot.slane %v1721, 7
  %v1725 = vmul.f32 %v1720, %v1723
  %v1726 = vadd.f32 %v1491, %v1725
  %v1727 = vtanh.pop %v1726
  %v1728 = vsub.f32 1.0, %v1720
  %1730 = vrot.lane.b32.xlu0 %v1727, 64
  %v1731 = vpop.permute.xlu0 %1730
  %v1733 = vmul.f32 %v1728, %v1731
  %v1735 = vmul.f32 %v1720, %v1635
  %v1736 = vadd.f32 %v1733, %v1735
  %v1738 = vrot.slane %v1736, 1
  %1739 = vrot.lane.b32.xlu0 %v1738, 64
  %v1740 = vpop.permute.xlu0 %1739
  %v1741 = vsel %vm1534, %v1740, 0
  %1743 = vmatprep.subr.mxu0 %v1518
  %1744 = vmatpush1.msra.mxu0 %v1517
  %1745 = vmatprep.subr.mxu0 %v1520
  %1746 = vmatpush1.msra.mxu0 %v1519
  %1747 = vmatprep.subr.mxu0 %v1522
  %1748 = vmatpush1.msra.mxu0 %v1521
  %1749 = vmatprep.subr.mxu0 %v1524
  %1750 = vmatpush1.msra.mxu0 %v1523
  %1751 = vmatprep.subr.mxu0 %v1526
  %1752 = vmatpush1.msra.mxu0 %v1525
  %1753 = vmatprep.subr.mxu0 %v1528
  %1754 = vmatpush1.msra.mxu0 %v1527
  %1755 = vmatprep.subr.mxu0 %v1530
  %1756 = vmatpush1.msra.mxu0 %v1529
  %1757 = vmatprep.subr.mxu0 %v1532
  %1758 = vmatpush1.msra.mxu0 %v1531
  %1759 = vmatprep.subr.mxu0 0.0
  %1760 = vmatpush1.msra.mxu0 0.0
  %1761 = vmatprep.subr.mxu0 0.0
  %1762 = vmatpush1.msra.mxu0 0.0
  %1763 = vmatprep.subr.mxu0 0.0
  %1764 = vmatpush1.msra.mxu0 0.0
  %1765 = vmatprep.subr.mxu0 0.0
  %1766 = vmatpush1.msra.mxu0 0.0
  %1767 = vmatprep.subr.mxu0 0.0
  %1768 = vmatpush1.msra.mxu0 0.0
  %1769 = vmatprep.subr.mxu0 0.0
  %1770 = vmatpush1.msra.mxu0 0.0
  %1771 = vmatprep.subr.mxu0 0.0
  %1772 = vmatpush1.msra.mxu0 0.0
  %1773 = vmatprep.subr.mxu0 0.0
  %1774 = vmatpush1.msra.mxu0 0.0
  %1775 = vmatprep.subr.mxu0 0.0
  %1776 = vmatpush1.msra.mxu0 0.0
  %1777 = vmatprep.subr.mxu0 0.0
  %1778 = vmatpush1.msra.mxu0 0.0
  %1779 = vmatprep.subr.mxu0 0.0
  %1780 = vmatpush1.msra.mxu0 0.0
  %1781 = vmatprep.subr.mxu0 0.0
  %1782 = vmatpush1.msra.mxu0 0.0
  %1783 = vmatprep.subr.mxu0 0.0
  %1784 = vmatpush1.msra.mxu0 0.0
  %1785 = vmatprep.subr.mxu0 0.0
  %1786 = vmatpush1.msra.mxu0 0.0
  %1787 = vmatprep.subr.mxu0 0.0
  %1788 = vmatpush1.msra.mxu0 0.0
  %1789 = vmatprep.subr.mxu0 0.0
  %1790 = vmatpush1.msra.mxu0 0.0
  %1791 = vmatprep.subr.mxu0 0.0
  %1792 = vmatpush1.msra.mxu0 0.0
  %1793 = vmatprep.subr.mxu0 0.0
  %1794 = vmatpush1.msra.mxu0 0.0
  %1795 = vmatprep.subr.mxu0 0.0
  %1796 = vmatpush1.msra.mxu0 0.0
  %1797 = vmatprep.subr.mxu0 0.0
  %1798 = vmatpush1.msra.mxu0 0.0
  %1799 = vmatprep.subr.mxu0 0.0
  %1800 = vmatpush1.msra.mxu0 0.0
  %1801 = vmatprep.subr.mxu0 0.0
  %1802 = vmatpush1.msra.mxu0 0.0
  %1803 = vmatprep.subr.mxu0 0.0
  %1804 = vmatpush1.msra.mxu0 0.0
  %1805 = vmatprep.subr.mxu0 0.0
  %1806 = vmatpush1.msra.mxu0 0.0
  %1807 = vmatprep.mubr.f32.mxu0 0.0
  %1808 = vmatmul.mubr.f32.gmra.mrb[0].mxu0 %v1741
  %v1809 = vpop.f32.mrb[0].mxu0
  %v1810 = vadd.f32 0.0, %v1809
  %v1811 = vpop.f32.mrb[0].mxu0
  %v1812 = vadd.f32 0.0, %v1811
  %1813 = vdwg.mxu0
  %v1814 = vadd.f32 %v1516, %v1810
  %v1815 = vxor.u32 %v1814, 2147483648
  %v1816 = vmul.f32 %v1815, 1.442695
  %v1817 = vpow.pop %v1816
  %v1818 = vadd.f32 %v1817, 1.0
  %v1819 = vrcp.pop %v1818
  %v1820 = vmul.f32 1.0, %v1819
  %v1821 = vadd.f32 %v1812, %v1533
  %v1822 = vmul.f32 %v1820, %v1821
  %v1824 = vrot.slane %v1516, 1
  %v1826 = vadd.f32 %v1824, %v1822
  %v1827 = vtanh.pop %v1826
  %v1828 = vsub.f32 1.0, %v1820
  %1830 = vrot.lane.b32.xlu0 %v1827, 64
  %v1831 = vpop.permute.xlu0 %1830
  %v1833 = vmul.f32 %v1828, %v1831
  %v1835 = vunpack.c.l.s4 1966171168
  %v1836 = vunpack.c.0.s8 %v1835
  %v1837 = vlaneseq
  %v1838 = vshrl.u32 %v1837, 7
  %v1839 = vsub.s32 %v1836, %v1838
  %v1840 = vrot.slane %v1736, %v1839
  %v1841 = vcombine.high %v1840, %v1840
  %v1843 = vunpack.c.l.s4 1966171168
  %v1844 = vunpack.c.0.s8 %v1843
  %v1845 = vlaneseq
  %v1846 = vshrl.u32 %v1845, 7
  %v1847 = vsub.s32 %v1844, %v1846
  %v1848 = vrot.slane %v1841, %v1847
  %v1850 = vmul.f32 %v1820, %v1848
  %v1851 = vadd.f32 %v1833, %v1850
  %v1854 = vlaneseq
  %v1855 = vshrl.u32 %v1854, 7
  %v1856 = vsub.s32 0, %v1855
  %v1857 = vrot.slane %v1851, %v1856
  %1858 = vrot.lane.b32.xlu0 %v1857, 64
  %v1859 = vpop.permute.xlu0 %1858
  %1861 = vrot.lane.b32.xlu0 %v1738, 96
  %v1862 = vpop.permute.xlu0 %1861
  %v1864 = vsel %vm157, %v1637, %v1859
  %v1865 = vsel %vm1190, %v1864, %v1862
  %vm1866 = vcmask 392192
  %v1867 = vsel %vm1866, %v1865, %v1862
  %v1868 = vsel %vm1534, %v1867, %v1851
  %vm1869 = vcmask 654336
  %v1870 = vsel %vm1869, %v1868, %v1630
  %1871 = vrot.lane.b32.xlu0 %v1635, 32
  %v1872 = vpop.permute.xlu0 %1871
  %1874 = vrot.lane.b32.xlu0 %v1857, 32
  %v1875 = vpop.permute.xlu0 %1874
  %1878 = vrot.lane.b32.xlu0 %v1857, 96
  %v1879 = vpop.permute.xlu0 %1878
  %1881 = vrot.lane.b32.xlu0 %v1635, 96
  %v1882 = vpop.permute.xlu0 %1881
  %v1884 = vsel %vm157, %v1872, %v1875
  %v1885 = vsel %vm1190, %v1884, %v1740
  %v1886 = vsel %vm1866, %v1885, %v1740
  %v1887 = vsel %vm1534, %v1886, %v1879
  %v1888 = vsel %vm1869, %v1887, %v1882
  %v1890 = vrot.slane %v1888, 7
  %v1892 = vsel %vm276, %v1870, %v1890
  %vm1893 = vcmask 779264
  %1894 = vst.msk [vmem:[%s3] sm:$0x3] %vm1893, %v1892
  // Predicated region
  $region14: #{_forward.1} parent=0 // pred_check
    _
  $region15: #{_forward.1} parent=0 // pred_check_branch
    %1896 = sbr.rel (0) target = $region17
  $region16: #{_forward.1} parent=0 // pred_region
    _
  $region17: #{_forward.1} parent=0 // pred_fallthru
    _
  // Predicated region
  $region18: #{_forward.1} parent=0 // pred_check
    _
  $region19: #{_forward.1} parent=0 // pred_check_branch
    %1898 = sbr.rel (0) target = $region21
  $region20: #{_forward.1} parent=0 // pred_region
    _
  $region21: #{_forward.1} parent=0 // pred_fallthru
    _

</llo_original>
